<compile_context>
chip_gen: v7x
topology: tpu7x:2x2x1
jax: 0.10.0
libtpu: 0.0.40
codegen_flags: <defaults>
</compile_context>

<pallas_src>
import numpy as np

import jax
import jax.numpy as jnp
from jax import lax
from jax.experimental import pallas as pl
from jax.experimental.pallas import tpu as pltpu


# ---------------------------------------------------------------------------
# The single fused Pallas kernel
# ---------------------------------------------------------------------------

def _convnet_fused_kernel(x0_ref, hs1_ref, t1_ref, b1_ref, rp1_ref, cp1_ref,
                          hs2_ref, t2_ref, b2_ref, nsra_ref, cawb_ref,
                          bf1_ref, wf2_ref, bf2_ref, o_ref):
    def mm(a, b):
        return jnp.dot(a, b, preferred_element_type=jnp.float32)

    x0 = x0_ref[...]                                            # [N*16, 64]

    # conv1 (3x3, stride 1, pad 1) + bias + ReLU  ->  [N*16, 128]
    acc = mm(x0, t1_ref[1])                                     # center H tap: identity shift
    acc = acc + mm(mm(hs1_ref[0], x0), t1_ref[0])               # H tap d = -1
    acc = acc + mm(mm(hs1_ref[1], x0), t1_ref[2])               # H tap d = +1
    y1 = jnp.maximum(acc + b1_ref[...], 0.0)

    # max-pool 2x2 (stride 2)  ->  [N*8, 64]
    mh = jnp.maximum(mm(rp1_ref[0], y1), mm(rp1_ref[1], y1))
    p1 = jnp.maximum(mm(mh, cp1_ref[0]), mm(mh, cp1_ref[1]))

    # conv2 (3x3, stride 1, pad 1) + bias + ReLU  ->  [N*8, 128]
    acc2 = mm(p1, t2_ref[1])
    acc2 = acc2 + mm(mm(hs2_ref[0], p1), t2_ref[0])
    acc2 = acc2 + mm(mm(hs2_ref[1], p1), t2_ref[2])
    y2 = jnp.maximum(acc2 + b2_ref[...], 0.0)

    # avg-pool 2x2 + NCHW flatten + Linear, all linear -> pre-folded offline into
    # (nsra[r], cawb[r]); then ReLU  ->  [N, 32]
    h1 = mm(mm(nsra_ref[0], y2), cawb_ref[0])
    for r in range(1, 4):
        h1 = h1 + mm(mm(nsra_ref[r], y2), cawb_ref[r])
    h1 = jnp.maximum(h1 + bf1_ref[...], 0.0)

    # final Linear 32 -> 1 as VPU multiply + lane reduction  ->  [N, 1]
    o = jnp.sum(h1 * wf2_ref[...], axis=1, keepdims=True) + bf2_ref[...]
    o_ref[...] = o.astype(o_ref.dtype)


# ---------------------------------------------------------------------------
# One-time (offline) operand preparation: fold shifts / padding / pooling /
# flatten-order into small dense matrices that feed pure 2-D MXU matmuls.
# ---------------------------------------------------------------------------

def prepare_operands(params, batch):
    w1 = np.asarray(params["w1"], np.float32)     # [3,3,C0,F1]  (HWIO)
    b1 = np.asarray(params["b1"], np.float32)
    w2 = np.asarray(params["w2"], np.float32)     # [3,3,F1,F2]
    b2 = np.asarray(params["b2"], np.float32)
    wf1 = np.asarray(params["wf1"], np.float32)   # [F2*H3*W3, HID] (NCHW-flatten rows)
    bf1 = np.asarray(params["bf1"], np.float32)
    wf2 = np.asarray(params["wf2"], np.float32)   # [HID, 1]
    bf2 = np.asarray(params["bf2"], np.float32)

    N = batch
    H1 = W1 = 16
    C0, F1 = w1.shape[2], w1.shape[3]
    H2 = W2 = 8
    F2 = w2.shape[3]
    H3 = W3 = 4
    HID = wf1.shape[1]
    assert wf2.shape == (HID, 1)

    # --- conv1: off-center H-tap shift selectors (center tap == identity, skipped)
    hs1 = np.zeros((2, N * H1, N * H1), np.float32)
    for k, d in enumerate((-1, 1)):
        for n in range(N):
            for h in range(H1):
                hin = h + d
                if 0 <= hin < H1:
                    hs1[k, n * H1 + h, n * H1 + hin] = 1.0
    # lane Toeplitz weights: all W taps, W zero-padding, channel contraction
    t1 = np.zeros((3, W1 * C0, W1 * F1), np.float32)
    for i in range(3):
        for w in range(W1):
            for j in range(3):
                win = w + j - 1
                if 0 <= win < W1:
                    t1[i, win * C0:(win + 1) * C0, w * F1:(w + 1) * F1] = w1[i, j]
    b1r = np.tile(b1, W1)[None, :]                                  # [1, 128]

    # --- max-pool 1: row-pair and lane-pair selectors ------------------------
    rp1 = np.zeros((2, N * H2, N * H1), np.float32)
    for n in range(N):
        for h in range(H2):
            rp1[0, n * H2 + h, n * H1 + 2 * h] = 1.0
            rp1[1, n * H2 + h, n * H1 + 2 * h + 1] = 1.0
    cp1 = np.zeros((2, W1 * F1, W2 * F1), np.float32)
    for w in range(W2):
        for f in range(F1):
            cp1[0, (2 * w) * F1 + f, w * F1 + f] = 1.0
            cp1[1, (2 * w + 1) * F1 + f, w * F1 + f] = 1.0

    # --- conv2 ----------------------------------------------------------------
    hs2 = np.zeros((2, N * H2, N * H2), np.float32)
    for k, d in enumerate((-1, 1)):
        for n in range(N):
            for h in range(H2):
                hin = h + d
                if 0 <= hin < H2:
                    hs2[k, n * H2 + h, n * H2 + hin] = 1.0
    t2 = np.zeros((3, W2 * F1, W2 * F2), np.float32)
    for i in range(3):
        for w in range(W2):
            for j in range(3):
                win = w + j - 1
                if 0 <= win < W2:
                    t2[i, win * F1:(win + 1) * F1, w * F2:(w + 1) * F2] = w2[i, j]
    b2r = np.tile(b2, W2)[None, :]                                  # [1, 128]

    # --- avg-pool 2 (linear) folded into MLP1 ---------------------------------
    # nsra[r] = (row selector for pooled row r of each image) @ (row averaging)
    nsra = np.zeros((H3, N, N * H2), np.float32)
    for r in range(H3):
        for n in range(N):
            nsra[r, n, n * H2 + 2 * r] = 0.5
            nsra[r, n, n * H2 + 2 * r + 1] = 0.5
    # cawb[r] = (lane averaging) @ (torch-NCHW-flatten-ordered fc1 weight block r)
    cawb = np.zeros((H3, W2 * F2, HID), np.float32)
    for r in range(H3):
        for w in range(W3):
            for f in range(F2):
                row = wf1[f * H3 * W3 + r * W3 + w, :]
                cawb[r, (2 * w) * F2 + f, :] = 0.5 * row
                cawb[r, (2 * w + 1) * F2 + f, :] = 0.5 * row
    bf1r = bf1[None, :]                                             # [1, HID]
    wf2r = wf2.reshape(1, HID)                                      # [1, HID]
    bf2r = bf2.reshape(1, 1)                                        # [1, 1]

    ops = [hs1, t1, b1r, rp1, cp1, hs2, t2, b2r, nsra, cawb, bf1r, wf2r, bf2r]
    return [jnp.asarray(o) for o in ops]


# ---------------------------------------------------------------------------
# Forward wrapper: one fused pallas_call
# ---------------------------------------------------------------------------

def convnet_forward(x_nchw, ops):
    N = x_nchw.shape[0]
    # Tiny XLA relayout of the network input into the kernel's [N*H, W*C] layout.
    x0 = jnp.transpose(x_nchw, (0, 2, 3, 1)).reshape(N * 16, 16 * 4)

    n_in = 1 + len(ops)
    bytes_accessed = 4 * (int(x0.size) + sum(int(o.size) for o in ops) + N)
    return pl.pallas_call(
        _convnet_fused_kernel,
        out_shape=jax.ShapeDtypeStruct((N, 1), jnp.float32),
        in_specs=[pl.BlockSpec(memory_space=pltpu.MemorySpace.VMEM)] * n_in,
        out_specs=pl.BlockSpec(memory_space=pltpu.MemorySpace.VMEM),
        cost_estimate=pl.CostEstimate(flops=4_500_000, transcendentals=0,
                                      bytes_accessed=bytes_accessed),
    )(x0, *ops)


# ---------------------------------------------------------------------------
# Pure-JAX reference (correctness check only)
# ---------------------------------------------------------------------------

def convnet_reference(x_nchw, params):
    x = jnp.transpose(x_nchw, (0, 2, 3, 1))
    dn = ("NHWC", "HWIO", "NHWC")

    x = lax.conv_general_dilated(x, params["w1"], (1, 1), ((1, 1), (1, 1)),
                                 dimension_numbers=dn) + params["b1"]
    x = jnp.maximum(x, 0.0)
    x = lax.reduce_window(x, -jnp.inf, lax.max, (1, 2, 2, 1), (1, 2, 2, 1), "VALID")

    x = lax.conv_general_dilated(x, params["w2"], (1, 1), ((1, 1), (1, 1)),
                                 dimension_numbers=dn) + params["b2"]
    x = jnp.maximum(x, 0.0)
    x = lax.reduce_window(x, 0.0, lax.add, (1, 2, 2, 1), (1, 2, 2, 1), "VALID") / 4.0

    N = x.shape[0]
    x = jnp.transpose(x, (0, 3, 1, 2)).reshape(N, -1)
    x = jnp.maximum(x @ params["wf1"] + params["bf1"], 0.0)
    x = x @ params["wf2"] + params["bf2"]
    return x


# ---------------------------------------------------------------------------
# Main
# ---------------------------------------------------------------------------

if __name__ == "__main__":
    key = jax.random.PRNGKey(0)
    ks = jax.random.split(key, 9)

    N, CIN, H, W = 2, 4, 16, 16
    F1, F2 = 8, 16
    HID, OUT = 32, 1
    FLAT = F2 * 4 * 4  # 256 after two 2x2 pools on 16x16

    params = {
        "w1": jax.random.normal(ks[0], (3, 3, CIN, F1), jnp.float32) * 0.1,
        "b1": jax.random.normal(ks[1], (F1,), jnp.float32) * 0.1,
        "w2": jax.random.normal(ks[2], (3, 3, F1, F2), jnp.float32) * 0.1,
        "b2": jax.random.normal(ks[3], (F2,), jnp.float32) * 0.1,
        "wf1": jax.random.normal(ks[4], (FLAT, HID), jnp.float32) * 0.05,
        "bf1": jax.random.normal(ks[5], (HID,), jnp.float32) * 0.05,
        "wf2": jax.random.normal(ks[6], (HID, OUT), jnp.float32) * 0.05,
        "bf2": jax.random.normal(ks[7], (OUT,), jnp.float32) * 0.05,
    }

    x = jax.random.normal(ks[8], (N, CIN, H, W), jnp.float32)

    ops = prepare_operands(params, batch=N)      # one-time offline weight folding
    fwd = jax.jit(convnet_forward)

    out = jax.block_until_ready(fwd(x, ops))
    ref = jax.block_until_ready(convnet_reference(x, params))

    assert out.shape == (N, OUT), out.shape
    assert jnp.allclose(out, ref, atol=1e-3, rtol=1e-3), (out, ref)
    print("KERNEL_OK")
</pallas_src>

<mosaic_0001>
module attributes {stable_mosaic.version = 11 : i64} {
  func.func @_convnet_fused_kernel(%arg0: memref<32x64xf32, #tpu.memory_space<vmem>>, %arg1: memref<2x32x32xf32, #tpu.memory_space<vmem>>, %arg2: memref<3x64x128xf32, #tpu.memory_space<vmem>>, %arg3: memref<1x128xf32, #tpu.memory_space<vmem>>, %arg4: memref<2x16x32xf32, #tpu.memory_space<vmem>>, %arg5: memref<2x128x64xf32, #tpu.memory_space<vmem>>, %arg6: memref<2x16x16xf32, #tpu.memory_space<vmem>>, %arg7: memref<3x64x128xf32, #tpu.memory_space<vmem>>, %arg8: memref<1x128xf32, #tpu.memory_space<vmem>>, %arg9: memref<4x2x16xf32, #tpu.memory_space<vmem>>, %arg10: memref<4x128x32xf32, #tpu.memory_space<vmem>>, %arg11: memref<1x32xf32, #tpu.memory_space<vmem>>, %arg12: memref<1x32xf32, #tpu.memory_space<vmem>>, %arg13: memref<1x1xf32, #tpu.memory_space<vmem>>, %arg14: memref<2x1xf32, #tpu.memory_space<vmem>>) attributes {dimension_semantics = [], scalar_prefetch = 0 : i64, scratch_operands = 0 : i64, tpu.core_type = #tpu.core_type<tc>} {
    %c0 = arith.constant 0 : index
    %c0_0 = arith.constant 0 : index
    %0 = vector.load %arg0[%c0, %c0_0] : memref<32x64xf32, #tpu.memory_space<vmem>>, vector<32x64xf32>
    %c1 = arith.constant 1 : index
    %c0_1 = arith.constant 0 : index
    %c0_2 = arith.constant 0 : index
    %1 = vector.load %arg2[%c1, %c0_1, %c0_2] : memref<3x64x128xf32, #tpu.memory_space<vmem>>, vector<1x64x128xf32>
    %2 = vector.shape_cast %1 : vector<1x64x128xf32> to vector<64x128xf32>
    %cst = arith.constant dense<0.000000e+00> : vector<32x128xf32>
    %3 = tpu.matmul %0, %2, %cst {dimension_numbers = #tpu.dot_dimension_numbers<[1], [0], [0], [1], [0, 0, 1, 1], [], []>} : vector<32x64xf32>, vector<64x128xf32>, vector<32x128xf32> -> vector<32x128xf32>
    %c0_3 = arith.constant 0 : index
    %c0_4 = arith.constant 0 : index
    %c0_5 = arith.constant 0 : index
    %4 = vector.load %arg1[%c0_3, %c0_4, %c0_5] : memref<2x32x32xf32, #tpu.memory_space<vmem>>, vector<1x32x32xf32>
    %5 = vector.shape_cast %4 : vector<1x32x32xf32> to vector<32x32xf32>
    %cst_6 = arith.constant dense<0.000000e+00> : vector<32x64xf32>
    %6 = tpu.matmul %5, %0, %cst_6 {dimension_numbers = #tpu.dot_dimension_numbers<[1], [0], [0], [1], [0, 0, 1, 1], [], []>} : vector<32x32xf32>, vector<32x64xf32>, vector<32x64xf32> -> vector<32x64xf32>
    %c0_7 = arith.constant 0 : index
    %c0_8 = arith.constant 0 : index
    %c0_9 = arith.constant 0 : index
    %7 = vector.load %arg2[%c0_7, %c0_8, %c0_9] : memref<3x64x128xf32, #tpu.memory_space<vmem>>, vector<1x64x128xf32>
    %8 = vector.shape_cast %7 : vector<1x64x128xf32> to vector<64x128xf32>
    %cst_10 = arith.constant dense<0.000000e+00> : vector<32x128xf32>
    %9 = tpu.matmul %6, %8, %cst_10 {dimension_numbers = #tpu.dot_dimension_numbers<[1], [0], [0], [1], [0, 0, 1, 1], [], []>} : vector<32x64xf32>, vector<64x128xf32>, vector<32x128xf32> -> vector<32x128xf32>
    %10 = arith.addf %3, %9 : vector<32x128xf32>
    %c1_11 = arith.constant 1 : index
    %c0_12 = arith.constant 0 : index
    %c0_13 = arith.constant 0 : index
    %11 = vector.load %arg1[%c1_11, %c0_12, %c0_13] : memref<2x32x32xf32, #tpu.memory_space<vmem>>, vector<1x32x32xf32>
    %12 = vector.shape_cast %11 : vector<1x32x32xf32> to vector<32x32xf32>
    %cst_14 = arith.constant dense<0.000000e+00> : vector<32x64xf32>
    %13 = tpu.matmul %12, %0, %cst_14 {dimension_numbers = #tpu.dot_dimension_numbers<[1], [0], [0], [1], [0, 0, 1, 1], [], []>} : vector<32x32xf32>, vector<32x64xf32>, vector<32x64xf32> -> vector<32x64xf32>
    %c2 = arith.constant 2 : index
    %c0_15 = arith.constant 0 : index
    %c0_16 = arith.constant 0 : index
    %14 = vector.load %arg2[%c2, %c0_15, %c0_16] : memref<3x64x128xf32, #tpu.memory_space<vmem>>, vector<1x64x128xf32>
    %15 = vector.shape_cast %14 : vector<1x64x128xf32> to vector<64x128xf32>
    %cst_17 = arith.constant dense<0.000000e+00> : vector<32x128xf32>
    %16 = tpu.matmul %13, %15, %cst_17 {dimension_numbers = #tpu.dot_dimension_numbers<[1], [0], [0], [1], [0, 0, 1, 1], [], []>} : vector<32x64xf32>, vector<64x128xf32>, vector<32x128xf32> -> vector<32x128xf32>
    %17 = arith.addf %10, %16 : vector<32x128xf32>
    %c0_18 = arith.constant 0 : index
    %c0_19 = arith.constant 0 : index
    %18 = vector.load %arg3[%c0_18, %c0_19] : memref<1x128xf32, #tpu.memory_space<vmem>>, vector<1x128xf32>
    %19 = vector.broadcast %18 : vector<1x128xf32> to vector<32x128xf32>
    %20 = arith.addf %17, %19 : vector<32x128xf32>
    %cst_20 = arith.constant 0.000000e+00 : f32
    %21 = vector.broadcast %cst_20 : f32 to vector<32x128xf32>
    %22 = arith.maximumf %20, %21 : vector<32x128xf32>
    %c0_21 = arith.constant 0 : index
    %c0_22 = arith.constant 0 : index
    %c0_23 = arith.constant 0 : index
    %23 = vector.load %arg4[%c0_21, %c0_22, %c0_23] : memref<2x16x32xf32, #tpu.memory_space<vmem>>, vector<1x16x32xf32>
    %24 = vector.shape_cast %23 : vector<1x16x32xf32> to vector<16x32xf32>
    %cst_24 = arith.constant dense<0.000000e+00> : vector<16x128xf32>
    %25 = tpu.matmul %24, %22, %cst_24 {dimension_numbers = #tpu.dot_dimension_numbers<[1], [0], [0], [1], [0, 0, 1, 1], [], []>} : vector<16x32xf32>, vector<32x128xf32>, vector<16x128xf32> -> vector<16x128xf32>
    %c1_25 = arith.constant 1 : index
    %c0_26 = arith.constant 0 : index
    %c0_27 = arith.constant 0 : index
    %26 = vector.load %arg4[%c1_25, %c0_26, %c0_27] : memref<2x16x32xf32, #tpu.memory_space<vmem>>, vector<1x16x32xf32>
    %27 = vector.shape_cast %26 : vector<1x16x32xf32> to vector<16x32xf32>
    %cst_28 = arith.constant dense<0.000000e+00> : vector<16x128xf32>
    %28 = tpu.matmul %27, %22, %cst_28 {dimension_numbers = #tpu.dot_dimension_numbers<[1], [0], [0], [1], [0, 0, 1, 1], [], []>} : vector<16x32xf32>, vector<32x128xf32>, vector<16x128xf32> -> vector<16x128xf32>
    %29 = arith.maximumf %25, %28 : vector<16x128xf32>
    %c0_29 = arith.constant 0 : index
    %c0_30 = arith.constant 0 : index
    %c0_31 = arith.constant 0 : index
    %30 = vector.load %arg5[%c0_29, %c0_30, %c0_31] : memref<2x128x64xf32, #tpu.memory_space<vmem>>, vector<1x128x64xf32>
    %31 = vector.shape_cast %30 : vector<1x128x64xf32> to vector<128x64xf32>
    %cst_32 = arith.constant dense<0.000000e+00> : vector<16x64xf32>
    %32 = tpu.matmul %29, %31, %cst_32 {dimension_numbers = #tpu.dot_dimension_numbers<[1], [0], [0], [1], [0, 0, 1, 1], [], []>} : vector<16x128xf32>, vector<128x64xf32>, vector<16x64xf32> -> vector<16x64xf32>
    %c1_33 = arith.constant 1 : index
    %c0_34 = arith.constant 0 : index
    %c0_35 = arith.constant 0 : index
    %33 = vector.load %arg5[%c1_33, %c0_34, %c0_35] : memref<2x128x64xf32, #tpu.memory_space<vmem>>, vector<1x128x64xf32>
    %34 = vector.shape_cast %33 : vector<1x128x64xf32> to vector<128x64xf32>
    %cst_36 = arith.constant dense<0.000000e+00> : vector<16x64xf32>
    %35 = tpu.matmul %29, %34, %cst_36 {dimension_numbers = #tpu.dot_dimension_numbers<[1], [0], [0], [1], [0, 0, 1, 1], [], []>} : vector<16x128xf32>, vector<128x64xf32>, vector<16x64xf32> -> vector<16x64xf32>
    %36 = arith.maximumf %32, %35 : vector<16x64xf32>
    %c1_37 = arith.constant 1 : index
    %c0_38 = arith.constant 0 : index
    %c0_39 = arith.constant 0 : index
    %37 = vector.load %arg7[%c1_37, %c0_38, %c0_39] : memref<3x64x128xf32, #tpu.memory_space<vmem>>, vector<1x64x128xf32>
    %38 = vector.shape_cast %37 : vector<1x64x128xf32> to vector<64x128xf32>
    %cst_40 = arith.constant dense<0.000000e+00> : vector<16x128xf32>
    %39 = tpu.matmul %36, %38, %cst_40 {dimension_numbers = #tpu.dot_dimension_numbers<[1], [0], [0], [1], [0, 0, 1, 1], [], []>} : vector<16x64xf32>, vector<64x128xf32>, vector<16x128xf32> -> vector<16x128xf32>
    %c0_41 = arith.constant 0 : index
    %c0_42 = arith.constant 0 : index
    %c0_43 = arith.constant 0 : index
    %40 = vector.load %arg6[%c0_41, %c0_42, %c0_43] : memref<2x16x16xf32, #tpu.memory_space<vmem>>, vector<1x16x16xf32>
    %41 = vector.shape_cast %40 : vector<1x16x16xf32> to vector<16x16xf32>
    %cst_44 = arith.constant dense<0.000000e+00> : vector<16x64xf32>
    %42 = tpu.matmul %41, %36, %cst_44 {dimension_numbers = #tpu.dot_dimension_numbers<[1], [0], [0], [1], [0, 0, 1, 1], [], []>} : vector<16x16xf32>, vector<16x64xf32>, vector<16x64xf32> -> vector<16x64xf32>
    %c0_45 = arith.constant 0 : index
    %c0_46 = arith.constant 0 : index
    %c0_47 = arith.constant 0 : index
    %43 = vector.load %arg7[%c0_45, %c0_46, %c0_47] : memref<3x64x128xf32, #tpu.memory_space<vmem>>, vector<1x64x128xf32>
    %44 = vector.shape_cast %43 : vector<1x64x128xf32> to vector<64x128xf32>
    %cst_48 = arith.constant dense<0.000000e+00> : vector<16x128xf32>
    %45 = tpu.matmul %42, %44, %cst_48 {dimension_numbers = #tpu.dot_dimension_numbers<[1], [0], [0], [1], [0, 0, 1, 1], [], []>} : vector<16x64xf32>, vector<64x128xf32>, vector<16x128xf32> -> vector<16x128xf32>
    %46 = arith.addf %39, %45 : vector<16x128xf32>
    %c1_49 = arith.constant 1 : index
    %c0_50 = arith.constant 0 : index
    %c0_51 = arith.constant 0 : index
    %47 = vector.load %arg6[%c1_49, %c0_50, %c0_51] : memref<2x16x16xf32, #tpu.memory_space<vmem>>, vector<1x16x16xf32>
    %48 = vector.shape_cast %47 : vector<1x16x16xf32> to vector<16x16xf32>
    %cst_52 = arith.constant dense<0.000000e+00> : vector<16x64xf32>
    %49 = tpu.matmul %48, %36, %cst_52 {dimension_numbers = #tpu.dot_dimension_numbers<[1], [0], [0], [1], [0, 0, 1, 1], [], []>} : vector<16x16xf32>, vector<16x64xf32>, vector<16x64xf32> -> vector<16x64xf32>
    %c2_53 = arith.constant 2 : index
    %c0_54 = arith.constant 0 : index
    %c0_55 = arith.constant 0 : index
    %50 = vector.load %arg7[%c2_53, %c0_54, %c0_55] : memref<3x64x128xf32, #tpu.memory_space<vmem>>, vector<1x64x128xf32>
    %51 = vector.shape_cast %50 : vector<1x64x128xf32> to vector<64x128xf32>
    %cst_56 = arith.constant dense<0.000000e+00> : vector<16x128xf32>
    %52 = tpu.matmul %49, %51, %cst_56 {dimension_numbers = #tpu.dot_dimension_numbers<[1], [0], [0], [1], [0, 0, 1, 1], [], []>} : vector<16x64xf32>, vector<64x128xf32>, vector<16x128xf32> -> vector<16x128xf32>
    %53 = arith.addf %46, %52 : vector<16x128xf32>
    %c0_57 = arith.constant 0 : index
    %c0_58 = arith.constant 0 : index
    %54 = vector.load %arg8[%c0_57, %c0_58] : memref<1x128xf32, #tpu.memory_space<vmem>>, vector<1x128xf32>
    %55 = vector.broadcast %54 : vector<1x128xf32> to vector<16x128xf32>
    %56 = arith.addf %53, %55 : vector<16x128xf32>
    %cst_59 = arith.constant 0.000000e+00 : f32
    %57 = vector.broadcast %cst_59 : f32 to vector<16x128xf32>
    %58 = arith.maximumf %56, %57 : vector<16x128xf32>
    %c0_60 = arith.constant 0 : index
    %c0_61 = arith.constant 0 : index
    %c0_62 = arith.constant 0 : index
    %59 = vector.load %arg9[%c0_60, %c0_61, %c0_62] : memref<4x2x16xf32, #tpu.memory_space<vmem>>, vector<1x2x16xf32>
    %60 = vector.shape_cast %59 : vector<1x2x16xf32> to vector<2x16xf32>
    %cst_63 = arith.constant dense<0.000000e+00> : vector<2x128xf32>
    %61 = tpu.matmul %60, %58, %cst_63 {dimension_numbers = #tpu.dot_dimension_numbers<[1], [0], [0], [1], [0, 0, 1, 1], [], []>} : vector<2x16xf32>, vector<16x128xf32>, vector<2x128xf32> -> vector<2x128xf32>
    %c0_64 = arith.constant 0 : index
    %c0_65 = arith.constant 0 : index
    %c0_66 = arith.constant 0 : index
    %62 = vector.load %arg10[%c0_64, %c0_65, %c0_66] : memref<4x128x32xf32, #tpu.memory_space<vmem>>, vector<1x128x32xf32>
    %63 = vector.shape_cast %62 : vector<1x128x32xf32> to vector<128x32xf32>
    %cst_67 = arith.constant dense<0.000000e+00> : vector<2x32xf32>
    %64 = tpu.matmul %61, %63, %cst_67 {dimension_numbers = #tpu.dot_dimension_numbers<[1], [0], [0], [1], [0, 0, 1, 1], [], []>} : vector<2x128xf32>, vector<128x32xf32>, vector<2x32xf32> -> vector<2x32xf32>
    %c1_68 = arith.constant 1 : index
    %c0_69 = arith.constant 0 : index
    %c0_70 = arith.constant 0 : index
    %65 = vector.load %arg9[%c1_68, %c0_69, %c0_70] : memref<4x2x16xf32, #tpu.memory_space<vmem>>, vector<1x2x16xf32>
    %66 = vector.shape_cast %65 : vector<1x2x16xf32> to vector<2x16xf32>
    %cst_71 = arith.constant dense<0.000000e+00> : vector<2x128xf32>
    %67 = tpu.matmul %66, %58, %cst_71 {dimension_numbers = #tpu.dot_dimension_numbers<[1], [0], [0], [1], [0, 0, 1, 1], [], []>} : vector<2x16xf32>, vector<16x128xf32>, vector<2x128xf32> -> vector<2x128xf32>
    %c1_72 = arith.constant 1 : index
    %c0_73 = arith.constant 0 : index
    %c0_74 = arith.constant 0 : index
    %68 = vector.load %arg10[%c1_72, %c0_73, %c0_74] : memref<4x128x32xf32, #tpu.memory_space<vmem>>, vector<1x128x32xf32>
    %69 = vector.shape_cast %68 : vector<1x128x32xf32> to vector<128x32xf32>
    %cst_75 = arith.constant dense<0.000000e+00> : vector<2x32xf32>
    %70 = tpu.matmul %67, %69, %cst_75 {dimension_numbers = #tpu.dot_dimension_numbers<[1], [0], [0], [1], [0, 0, 1, 1], [], []>} : vector<2x128xf32>, vector<128x32xf32>, vector<2x32xf32> -> vector<2x32xf32>
    %71 = arith.addf %64, %70 : vector<2x32xf32>
    %c2_76 = arith.constant 2 : index
    %c0_77 = arith.constant 0 : index
    %c0_78 = arith.constant 0 : index
    %72 = vector.load %arg9[%c2_76, %c0_77, %c0_78] : memref<4x2x16xf32, #tpu.memory_space<vmem>>, vector<1x2x16xf32>
    %73 = vector.shape_cast %72 : vector<1x2x16xf32> to vector<2x16xf32>
    %cst_79 = arith.constant dense<0.000000e+00> : vector<2x128xf32>
    %74 = tpu.matmul %73, %58, %cst_79 {dimension_numbers = #tpu.dot_dimension_numbers<[1], [0], [0], [1], [0, 0, 1, 1], [], []>} : vector<2x16xf32>, vector<16x128xf32>, vector<2x128xf32> -> vector<2x128xf32>
    %c2_80 = arith.constant 2 : index
    %c0_81 = arith.constant 0 : index
    %c0_82 = arith.constant 0 : index
    %75 = vector.load %arg10[%c2_80, %c0_81, %c0_82] : memref<4x128x32xf32, #tpu.memory_space<vmem>>, vector<1x128x32xf32>
    %76 = vector.shape_cast %75 : vector<1x128x32xf32> to vector<128x32xf32>
    %cst_83 = arith.constant dense<0.000000e+00> : vector<2x32xf32>
    %77 = tpu.matmul %74, %76, %cst_83 {dimension_numbers = #tpu.dot_dimension_numbers<[1], [0], [0], [1], [0, 0, 1, 1], [], []>} : vector<2x128xf32>, vector<128x32xf32>, vector<2x32xf32> -> vector<2x32xf32>
    %78 = arith.addf %71, %77 : vector<2x32xf32>
    %c3 = arith.constant 3 : index
    %c0_84 = arith.constant 0 : index
    %c0_85 = arith.constant 0 : index
    %79 = vector.load %arg9[%c3, %c0_84, %c0_85] : memref<4x2x16xf32, #tpu.memory_space<vmem>>, vector<1x2x16xf32>
    %80 = vector.shape_cast %79 : vector<1x2x16xf32> to vector<2x16xf32>
    %cst_86 = arith.constant dense<0.000000e+00> : vector<2x128xf32>
    %81 = tpu.matmul %80, %58, %cst_86 {dimension_numbers = #tpu.dot_dimension_numbers<[1], [0], [0], [1], [0, 0, 1, 1], [], []>} : vector<2x16xf32>, vector<16x128xf32>, vector<2x128xf32> -> vector<2x128xf32>
    %c3_87 = arith.constant 3 : index
    %c0_88 = arith.constant 0 : index
    %c0_89 = arith.constant 0 : index
    %82 = vector.load %arg10[%c3_87, %c0_88, %c0_89] : memref<4x128x32xf32, #tpu.memory_space<vmem>>, vector<1x128x32xf32>
    %83 = vector.shape_cast %82 : vector<1x128x32xf32> to vector<128x32xf32>
    %cst_90 = arith.constant dense<0.000000e+00> : vector<2x32xf32>
    %84 = tpu.matmul %81, %83, %cst_90 {dimension_numbers = #tpu.dot_dimension_numbers<[1], [0], [0], [1], [0, 0, 1, 1], [], []>} : vector<2x128xf32>, vector<128x32xf32>, vector<2x32xf32> -> vector<2x32xf32>
    %85 = arith.addf %78, %84 : vector<2x32xf32>
    %c0_91 = arith.constant 0 : index
    %c0_92 = arith.constant 0 : index
    %86 = vector.load %arg11[%c0_91, %c0_92] : memref<1x32xf32, #tpu.memory_space<vmem>>, vector<1x32xf32>
    %87 = vector.broadcast %86 : vector<1x32xf32> to vector<2x32xf32>
    %88 = arith.addf %85, %87 : vector<2x32xf32>
    %cst_93 = arith.constant 0.000000e+00 : f32
    %89 = vector.broadcast %cst_93 : f32 to vector<2x32xf32>
    %90 = arith.maximumf %88, %89 : vector<2x32xf32>
    %c0_94 = arith.constant 0 : index
    %c0_95 = arith.constant 0 : index
    %91 = vector.load %arg12[%c0_94, %c0_95] : memref<1x32xf32, #tpu.memory_space<vmem>>, vector<1x32xf32>
    %92 = vector.broadcast %91 : vector<1x32xf32> to vector<2x32xf32>
    %93 = arith.mulf %90, %92 : vector<2x32xf32>
    %cst_96 = arith.constant dense<0.000000e+00> : vector<2xf32>
    %94 = vector.multi_reduction <add>, %93, %cst_96 [1] : vector<2x32xf32> to vector<2xf32>
    %95 = vector.shape_cast %94 : vector<2xf32> to vector<2x1xf32>
    %c0_97 = arith.constant 0 : index
    %c0_98 = arith.constant 0 : index
    %96 = vector.load %arg13[%c0_97, %c0_98] : memref<1x1xf32, #tpu.memory_space<vmem>>, vector<1x1xf32>
    %97 = vector.broadcast %96 : vector<1x1xf32> to vector<2x1xf32>
    %98 = arith.addf %95, %97 : vector<2x1xf32>
    %c0_99 = arith.constant 0 : index
    %c0_100 = arith.constant 0 : index
    %99 = vector.load %arg14[%c0_99, %c0_100] : memref<2x1xf32, #tpu.memory_space<vmem>>, vector<2x1xf32>
    tpu.vector_store %arg14[%c0_99, %c0_100], %98 {strides = array<i32>} : memref<2x1xf32, #tpu.memory_space<vmem>>, vector<2x1xf32>,
    return
  }
}

</mosaic_0001>

<llo_original>
// kernel: convnet_forward.1
$region0: #{convnet_forward.1}
  #allocation0 [shape = 'u32[]', space=smem, size = 0x4, offset = 0x4, fixed_abs, tag = 'smem constant byte address 0x4 - core index']
  #allocation1 [shape = 'u32[144,128]{1,0:T(1,128)}', space=vmem, size = 0x12000, scoped, tag = 'internal scratch']
  #allocation2 [shape = 'f32[1,1]{1,0:T(1,128)S(1)}', space=vmem, size = 0x200, scoped, tag = 'scoped memory for convnet_forward.1']
  %s0 = inlined_call_operand.vmem [shape: f32[32,64], index: 0, kind: input, shape index: {}]
  %s1 = inlined_call_operand.vmem [shape: f32[2,32,32], index: 1, kind: input, shape index: {}]
  %s2 = inlined_call_operand.vmem [shape: f32[3,64,128], index: 2, kind: input, shape index: {}]
  %s3 = inlined_call_operand.vmem [shape: f32[1,128], index: 3, kind: input, shape index: {}]
  %s4 = inlined_call_operand.vmem [shape: f32[2,16,32], index: 4, kind: input, shape index: {}]
  %s5 = inlined_call_operand.vmem [shape: f32[2,128,64], index: 5, kind: input, shape index: {}]
  %s6 = inlined_call_operand.vmem [shape: f32[2,16,16], index: 6, kind: input, shape index: {}]
  %s7 = inlined_call_operand.vmem [shape: f32[3,64,128], index: 7, kind: input, shape index: {}]
  %s8 = inlined_call_operand.vmem [shape: f32[1,128], index: 8, kind: input, shape index: {}]
  %s9 = inlined_call_operand.vmem [shape: f32[4,2,16], index: 9, kind: input, shape index: {}]
  %s10 = inlined_call_operand.vmem [shape: f32[4,128,32], index: 10, kind: input, shape index: {}]
  %s11 = inlined_call_operand.vmem [shape: f32[1,32], index: 11, kind: input, shape index: {}]
  %s12 = inlined_call_operand.vmem [shape: f32[1,32], index: 12, kind: input, shape index: {}]
  %s13 = inlined_call_operand.<no memory space> [shape: f32[1,1], index: 13, kind: input, shape index: {}]
  %s14 = inlined_call_operand.vmem [shape: f32[2,1], index: 14, kind: output, shape index: {}]
  %s15 = sld [smem:[#allocation0]]
  $region66: #{convnet_forward.1} parent=0
    _
  %s17 = ssub.s32 1, %s15
  %s18 = scalar_select 0, %s17, %s15
  %v19 = vstv %s13
  %20 = vst [vmem:[#allocation2] sm:$0x1] %v19
  // Predicated region
  $region2: #{convnet_forward.1} parent=0 // pred_check
    _
  $region3: #{convnet_forward.1} parent=0 // pred_check_branch
    %22 = sbr.rel (0) target = $region5
  $region4: #{convnet_forward.1} parent=0 // pred_region
    _
  $region5: #{convnet_forward.1} parent=0 // pred_fallthru
    _
  // Predicated region
  $region6: #{convnet_forward.1} parent=0 // pred_check
    _
  $region7: #{convnet_forward.1} parent=0 // pred_check_branch
    %24 = sbr.rel (0) target = $region9
  $region8: #{convnet_forward.1} parent=0 // pred_region
    _
  $region9: #{convnet_forward.1} parent=0 // pred_fallthru
    _
  // Predicated region
  $region10: #{convnet_forward.1} parent=0 // pred_check
    _
  $region11: #{convnet_forward.1} parent=0 // pred_check_branch
    %26 = sbr.rel (0) target = $region13
  $region12: #{convnet_forward.1} parent=0 // pred_region
    _
  $region13: #{convnet_forward.1} parent=0 // pred_fallthru
    _
  // Predicated region
  $region14: #{convnet_forward.1} parent=0 // pred_check
    _
  $region15: #{convnet_forward.1} parent=0 // pred_check_branch
    %28 = sbr.rel (0) target = $region17
  $region16: #{convnet_forward.1} parent=0 // pred_region
    _
  $region17: #{convnet_forward.1} parent=0 // pred_fallthru
    _
  // Predicated region
  $region18: #{convnet_forward.1} parent=0 // pred_check
    _
  $region19: #{convnet_forward.1} parent=0 // pred_check_branch
    %30 = sbr.rel (0) target = $region21
  $region20: #{convnet_forward.1} parent=0 // pred_region
    _
  $region21: #{convnet_forward.1} parent=0 // pred_fallthru
    _
  // Predicated region
  $region22: #{convnet_forward.1} parent=0 // pred_check
    _
  $region23: #{convnet_forward.1} parent=0 // pred_check_branch
    %32 = sbr.rel (0) target = $region25
  $region24: #{convnet_forward.1} parent=0 // pred_region
    _
  $region25: #{convnet_forward.1} parent=0 // pred_fallthru
    _
  // Predicated region
  $region26: #{convnet_forward.1} parent=0 // pred_check
    _
  $region27: #{convnet_forward.1} parent=0 // pred_check_branch
    %34 = sbr.rel (0) target = $region29
  $region28: #{convnet_forward.1} parent=0 // pred_region
    _
  $region29: #{convnet_forward.1} parent=0 // pred_fallthru
    _
  // Predicated region
  $region30: #{convnet_forward.1} parent=0 // pred_check
    _
  $region31: #{convnet_forward.1} parent=0 // pred_check_branch
    %36 = sbr.rel (0) target = $region33
  $region32: #{convnet_forward.1} parent=0 // pred_region
    _
  $region33: #{convnet_forward.1} parent=0 // pred_fallthru
    _
  // Predicated region
  $region34: #{convnet_forward.1} parent=0 // pred_check
    _
  $region35: #{convnet_forward.1} parent=0 // pred_check_branch
    %38 = sbr.rel (0) target = $region37
  $region36: #{convnet_forward.1} parent=0 // pred_region
    _
  $region37: #{convnet_forward.1} parent=0 // pred_fallthru
    _
  // Predicated region
  $region38: #{convnet_forward.1} parent=0 // pred_check
    _
  $region39: #{convnet_forward.1} parent=0 // pred_check_branch
    %40 = sbr.rel (0) target = $region41
  $region40: #{convnet_forward.1} parent=0 // pred_region
    _
  $region41: #{convnet_forward.1} parent=0 // pred_fallthru
    _
  // Predicated region
  $region42: #{convnet_forward.1} parent=0 // pred_check
    _
  $region43: #{convnet_forward.1} parent=0 // pred_check_branch
    %42 = sbr.rel (0) target = $region45
  $region44: #{convnet_forward.1} parent=0 // pred_region
    _
  $region45: #{convnet_forward.1} parent=0 // pred_fallthru
    _
  // Predicated region
  $region46: #{convnet_forward.1} parent=0 // pred_check
    _
  $region47: #{convnet_forward.1} parent=0 // pred_check_branch
    %44 = sbr.rel (0) target = $region49
  $region48: #{convnet_forward.1} parent=0 // pred_region
    _
  $region49: #{convnet_forward.1} parent=0 // pred_fallthru
    _
  // Predicated region
  $region50: #{convnet_forward.1} parent=0 // pred_check
    _
  $region51: #{convnet_forward.1} parent=0 // pred_check_branch
    %46 = sbr.rel (0) target = $region53
  $region52: #{convnet_forward.1} parent=0 // pred_region
    _
  $region53: #{convnet_forward.1} parent=0 // pred_fallthru
    _
  // Predicated region
  $region54: #{convnet_forward.1} parent=0 // pred_check
    _
  $region55: #{convnet_forward.1} parent=0 // pred_check_branch
    %48 = sbr.rel (0) target = $region57
  $region56: #{convnet_forward.1} parent=0 // pred_region
    _
  $region57: #{convnet_forward.1} parent=0 // pred_fallthru
    _
  %v49 = vld [vmem:[%s0] sm:$0xff]
  %v50 = vld [vmem:[%s0 + $0x8] sm:$0xff]
  %v51 = vld [vmem:[%s0 + $0x10] sm:$0xff]
  %v52 = vld [vmem:[%s0 + $0x18] sm:$0xff]
  %s53 = scalar_lea.vmem %s2, 64
  %v54 = vld [vmem:[%s53] sm:$0xff]
  %v55 = vld [vmem:[%s53 + $0x8] sm:$0xff]
  %v56 = vld [vmem:[%s53 + $0x10] sm:$0xff]
  %v57 = vld [vmem:[%s53 + $0x18] sm:$0xff]
  %v58 = vld [vmem:[%s53 + $0x20] sm:$0xff]
  %v59 = vld [vmem:[%s53 + $0x28] sm:$0xff]
  %v60 = vld [vmem:[%s53 + $0x30] sm:$0xff]
  %v61 = vld [vmem:[%s53 + $0x38] sm:$0xff]
  %v62 = vld [vmem:[%s1] sm:$0xff]
  %v63 = vld [vmem:[%s1 + $0x8] sm:$0xff]
  %v64 = vld [vmem:[%s1 + $0x10] sm:$0xff]
  %v65 = vld [vmem:[%s1 + $0x18] sm:$0xff]
  %vm66 = vcmask 261120
  %v68 = vsel %vm66, %v62, 0
  %v71 = vsel %vm66, %v63, 0
  %v74 = vsel %vm66, %v64, 0
  %v77 = vsel %vm66, %v65, 0
  %79 = vmatprep.subr.mxu0 0.0
  %80 = vmatpush1.msra.mxu0 %v49
  %81 = vmatprep.subr.mxu0 0.0
  %82 = vmatpush1.msra.mxu0 %v50
  %83 = vmatprep.subr.mxu0 0.0
  %84 = vmatpush1.msra.mxu0 %v51
  %85 = vmatprep.subr.mxu0 0.0
  %86 = vmatpush1.msra.mxu0 %v52
  %87 = vmatprep.subr.mxu0 0.0
  %88 = vmatpush1.msra.mxu0 0.0
  %89 = vmatprep.subr.mxu0 0.0
  %90 = vmatpush1.msra.mxu0 0.0
  %91 = vmatprep.subr.mxu0 0.0
  %92 = vmatpush1.msra.mxu0 0.0
  %93 = vmatprep.subr.mxu0 0.0
  %94 = vmatpush1.msra.mxu0 0.0
  %95 = vmatprep.subr.mxu0 0.0
  %96 = vmatpush1.msra.mxu0 0.0
  %97 = vmatprep.subr.mxu0 0.0
  %98 = vmatpush1.msra.mxu0 0.0
  %99 = vmatprep.subr.mxu0 0.0
  %100 = vmatpush1.msra.mxu0 0.0
  %101 = vmatprep.subr.mxu0 0.0
  %102 = vmatpush1.msra.mxu0 0.0
  %103 = vmatprep.subr.mxu0 0.0
  %104 = vmatpush1.msra.mxu0 0.0
  %105 = vmatprep.subr.mxu0 0.0
  %106 = vmatpush1.msra.mxu0 0.0
  %107 = vmatprep.subr.mxu0 0.0
  %108 = vmatpush1.msra.mxu0 0.0
  %109 = vmatprep.subr.mxu0 0.0
  %110 = vmatpush1.msra.mxu0 0.0
  %111 = vmatprep.subr.mxu0 0.0
  %112 = vmatpush1.msra.mxu0 0.0
  %113 = vmatprep.subr.mxu0 0.0
  %114 = vmatpush1.msra.mxu0 0.0
  %115 = vmatprep.subr.mxu0 0.0
  %116 = vmatpush1.msra.mxu0 0.0
  %117 = vmatprep.subr.mxu0 0.0
  %118 = vmatpush1.msra.mxu0 0.0
  %119 = vmatprep.subr.mxu0 0.0
  %120 = vmatpush1.msra.mxu0 0.0
  %121 = vmatprep.subr.mxu0 0.0
  %122 = vmatpush1.msra.mxu0 0.0
  %123 = vmatprep.subr.mxu0 0.0
  %124 = vmatpush1.msra.mxu0 0.0
  %125 = vmatprep.subr.mxu0 0.0
  %126 = vmatpush1.msra.mxu0 0.0
  %127 = vmatprep.subr.mxu0 0.0
  %128 = vmatpush1.msra.mxu0 0.0
  %129 = vmatprep.subr.mxu0 0.0
  %130 = vmatpush1.msra.mxu0 0.0
  %131 = vmatprep.subr.mxu0 0.0
  %132 = vmatpush1.msra.mxu0 0.0
  %133 = vmatprep.subr.mxu0 0.0
  %134 = vmatpush1.msra.mxu0 0.0
  %135 = vmatprep.subr.mxu0 0.0
  %136 = vmatpush1.msra.mxu0 0.0
  %137 = vmatprep.subr.mxu0 0.0
  %138 = vmatpush1.msra.mxu0 0.0
  %139 = vmatprep.subr.mxu0 0.0
  %140 = vmatpush1.msra.mxu0 0.0
  %141 = vmatprep.subr.mxu0 0.0
  %142 = vmatpush1.msra.mxu0 0.0
  %143 = vmatprep.mubr.f32.mxu0 0.0
  %144 = vmatmul.mubr.f32.gmra.mrb[0].mxu0 %v68
  %v145 = vpop.f32.mrb[0].mxu0
  %v146 = vadd.f32 0.0, %v145
  %v147 = vpop.f32.mrb[0].mxu0
  %148 = vmatprep.mubr.f32.mxu0 0.0
  %149 = vmatmul.mubr.f32.gmra.mrb[0].mxu0 %v71
  %v150 = vpop.f32.mrb[0].mxu0
  %v151 = vadd.f32 0.0, %v150
  %v152 = vpop.f32.mrb[0].mxu0
  %153 = vmatprep.mubr.f32.mxu0 0.0
  %154 = vmatmul.mubr.f32.gmra.mrb[0].mxu0 %v74
  %v155 = vpop.f32.mrb[0].mxu0
  %v156 = vadd.f32 0.0, %v155
  %v157 = vpop.f32.mrb[0].mxu0
  %158 = vmatprep.mubr.f32.mxu0 0.0
  %159 = vmatmul.mubr.f32.gmra.mrb[0].mxu0 %v77
  %v160 = vpop.f32.mrb[0].mxu0
  %v161 = vadd.f32 0.0, %v160
  %v162 = vpop.f32.mrb[0].mxu0
  %163 = vdwg.mxu0
  %v164 = vld [vmem:[%s2] sm:$0xff]
  %v165 = vld [vmem:[%s2 + $0x8] sm:$0xff]
  %v166 = vld [vmem:[%s2 + $0x10] sm:$0xff]
  %v167 = vld [vmem:[%s2 + $0x18] sm:$0xff]
  %v168 = vld [vmem:[%s2 + $0x20] sm:$0xff]
  %v169 = vld [vmem:[%s2 + $0x28] sm:$0xff]
  %v170 = vld [vmem:[%s2 + $0x30] sm:$0xff]
  %v171 = vld [vmem:[%s2 + $0x38] sm:$0xff]
  %vm172 = vcmask 523264
  %v174 = vsel %vm172, %v146, 0
  %v177 = vsel %vm172, %v151, 0
  %v180 = vsel %vm172, %v156, 0
  %v183 = vsel %vm172, %v161, 0
  %185 = vmatprep.subr.mxu0 0.0
  %186 = vmatpush1.msra.mxu0 %v164
  %187 = vmatprep.subr.mxu0 0.0
  %188 = vmatpush1.msra.mxu0 %v165
  %189 = vmatprep.subr.mxu0 0.0
  %190 = vmatpush1.msra.mxu0 %v166
  %191 = vmatprep.subr.mxu0 0.0
  %192 = vmatpush1.msra.mxu0 %v167
  %193 = vmatprep.subr.mxu0 0.0
  %194 = vmatpush1.msra.mxu0 %v168
  %195 = vmatprep.subr.mxu0 0.0
  %196 = vmatpush1.msra.mxu0 %v169
  %197 = vmatprep.subr.mxu0 0.0
  %198 = vmatpush1.msra.mxu0 %v170
  %199 = vmatprep.subr.mxu0 0.0
  %200 = vmatpush1.msra.mxu0 %v171
  %201 = vmatprep.subr.mxu0 0.0
  %202 = vmatpush1.msra.mxu0 0.0
  %203 = vmatprep.subr.mxu0 0.0
  %204 = vmatpush1.msra.mxu0 0.0
  %205 = vmatprep.subr.mxu0 0.0
  %206 = vmatpush1.msra.mxu0 0.0
  %207 = vmatprep.subr.mxu0 0.0
  %208 = vmatpush1.msra.mxu0 0.0
  %209 = vmatprep.subr.mxu0 0.0
  %210 = vmatpush1.msra.mxu0 0.0
  %211 = vmatprep.subr.mxu0 0.0
  %212 = vmatpush1.msra.mxu0 0.0
  %213 = vmatprep.subr.mxu0 0.0
  %214 = vmatpush1.msra.mxu0 0.0
  %215 = vmatprep.subr.mxu0 0.0
  %216 = vmatpush1.msra.mxu0 0.0
  %217 = vmatprep.subr.mxu0 0.0
  %218 = vmatpush1.msra.mxu0 0.0
  %219 = vmatprep.subr.mxu0 0.0
  %220 = vmatpush1.msra.mxu0 0.0
  %221 = vmatprep.subr.mxu0 0.0
  %222 = vmatpush1.msra.mxu0 0.0
  %223 = vmatprep.subr.mxu0 0.0
  %224 = vmatpush1.msra.mxu0 0.0
  %225 = vmatprep.subr.mxu0 0.0
  %226 = vmatpush1.msra.mxu0 0.0
  %227 = vmatprep.subr.mxu0 0.0
  %228 = vmatpush1.msra.mxu0 0.0
  %229 = vmatprep.subr.mxu0 0.0
  %230 = vmatpush1.msra.mxu0 0.0
  %231 = vmatprep.subr.mxu0 0.0
  %232 = vmatpush1.msra.mxu0 0.0
  %233 = vmatprep.subr.mxu0 0.0
  %234 = vmatpush1.msra.mxu0 0.0
  %235 = vmatprep.subr.mxu0 0.0
  %236 = vmatpush1.msra.mxu0 0.0
  %237 = vmatprep.subr.mxu0 0.0
  %238 = vmatpush1.msra.mxu0 0.0
  %239 = vmatprep.subr.mxu0 0.0
  %240 = vmatpush1.msra.mxu0 0.0
  %241 = vmatprep.subr.mxu0 0.0
  %242 = vmatpush1.msra.mxu0 0.0
  %243 = vmatprep.subr.mxu0 0.0
  %244 = vmatpush1.msra.mxu0 0.0
  %245 = vmatprep.subr.mxu0 0.0
  %246 = vmatpush1.msra.mxu0 0.0
  %247 = vmatprep.subr.mxu0 0.0
  %248 = vmatpush1.msra.mxu0 0.0
  %249 = vmatprep.mubr.f32.mxu0 0.0
  %250 = vmatmul.mubr.f32.gmra.mrb[0].mxu0 %v174
  %v251 = vpop.f32.mrb[0].mxu0
  %v252 = vadd.f32 0.0, %v251
  %v253 = vpop.f32.mrb[0].mxu0
  %254 = vmatprep.mubr.f32.mxu0 0.0
  %255 = vmatmul.mubr.f32.gmra.mrb[0].mxu0 %v177
  %v256 = vpop.f32.mrb[0].mxu0
  %v257 = vadd.f32 0.0, %v256
  %v258 = vpop.f32.mrb[0].mxu0
  %259 = vmatprep.mubr.f32.mxu0 0.0
  %260 = vmatmul.mubr.f32.gmra.mrb[0].mxu0 %v180
  %v261 = vpop.f32.mrb[0].mxu0
  %v262 = vadd.f32 0.0, %v261
  %v263 = vpop.f32.mrb[0].mxu0
  %264 = vmatprep.mubr.f32.mxu0 0.0
  %265 = vmatmul.mubr.f32.gmra.mrb[0].mxu0 %v183
  %v266 = vpop.f32.mrb[0].mxu0
  %v267 = vadd.f32 0.0, %v266
  %v268 = vpop.f32.mrb[0].mxu0
  %269 = vdwg.mxu0
  %v271 = vsel %vm172, %v49, 0
  %v274 = vsel %vm172, %v50, 0
  %v277 = vsel %vm172, %v51, 0
  %v280 = vsel %vm172, %v52, 0
  %282 = vmatprep.subr.mxu0 0.0
  %283 = vmatpush1.msra.mxu0 %v54
  %284 = vmatprep.subr.mxu0 0.0
  %285 = vmatpush1.msra.mxu0 %v55
  %286 = vmatprep.subr.mxu0 0.0
  %287 = vmatpush1.msra.mxu0 %v56
  %288 = vmatprep.subr.mxu0 0.0
  %289 = vmatpush1.msra.mxu0 %v57
  %290 = vmatprep.subr.mxu0 0.0
  %291 = vmatpush1.msra.mxu0 %v58
  %292 = vmatprep.subr.mxu0 0.0
  %293 = vmatpush1.msra.mxu0 %v59
  %294 = vmatprep.subr.mxu0 0.0
  %295 = vmatpush1.msra.mxu0 %v60
  %296 = vmatprep.subr.mxu0 0.0
  %297 = vmatpush1.msra.mxu0 %v61
  %298 = vmatprep.subr.mxu0 0.0
  %299 = vmatpush1.msra.mxu0 0.0
  %300 = vmatprep.subr.mxu0 0.0
  %301 = vmatpush1.msra.mxu0 0.0
  %302 = vmatprep.subr.mxu0 0.0
  %303 = vmatpush1.msra.mxu0 0.0
  %304 = vmatprep.subr.mxu0 0.0
  %305 = vmatpush1.msra.mxu0 0.0
  %306 = vmatprep.subr.mxu0 0.0
  %307 = vmatpush1.msra.mxu0 0.0
  %308 = vmatprep.subr.mxu0 0.0
  %309 = vmatpush1.msra.mxu0 0.0
  %310 = vmatprep.subr.mxu0 0.0
  %311 = vmatpush1.msra.mxu0 0.0
  %312 = vmatprep.subr.mxu0 0.0
  %313 = vmatpush1.msra.mxu0 0.0
  %314 = vmatprep.subr.mxu0 0.0
  %315 = vmatpush1.msra.mxu0 0.0
  %316 = vmatprep.subr.mxu0 0.0
  %317 = vmatpush1.msra.mxu0 0.0
  %318 = vmatprep.subr.mxu0 0.0
  %319 = vmatpush1.msra.mxu0 0.0
  %320 = vmatprep.subr.mxu0 0.0
  %321 = vmatpush1.msra.mxu0 0.0
  %322 = vmatprep.subr.mxu0 0.0
  %323 = vmatpush1.msra.mxu0 0.0
  %324 = vmatprep.subr.mxu0 0.0
  %325 = vmatpush1.msra.mxu0 0.0
  %326 = vmatprep.subr.mxu0 0.0
  %327 = vmatpush1.msra.mxu0 0.0
  %328 = vmatprep.subr.mxu0 0.0
  %329 = vmatpush1.msra.mxu0 0.0
  %330 = vmatprep.subr.mxu0 0.0
  %331 = vmatpush1.msra.mxu0 0.0
  %332 = vmatprep.subr.mxu0 0.0
  %333 = vmatpush1.msra.mxu0 0.0
  %334 = vmatprep.subr.mxu0 0.0
  %335 = vmatpush1.msra.mxu0 0.0
  %336 = vmatprep.subr.mxu0 0.0
  %337 = vmatpush1.msra.mxu0 0.0
  %338 = vmatprep.subr.mxu0 0.0
  %339 = vmatpush1.msra.mxu0 0.0
  %340 = vmatprep.subr.mxu0 0.0
  %341 = vmatpush1.msra.mxu0 0.0
  %342 = vmatprep.subr.mxu0 0.0
  %343 = vmatpush1.msra.mxu0 0.0
  %344 = vmatprep.subr.mxu0 0.0
  %345 = vmatpush1.msra.mxu0 0.0
  %346 = vmatprep.mubr.f32.mxu0 0.0
  %347 = vmatmul.mubr.f32.gmra.mrb[0].mxu0 %v271
  %v348 = vpop.f32.mrb[0].mxu0
  %v349 = vadd.f32 %v252, %v348
  %v350 = vpop.f32.mrb[0].mxu0
  %351 = vmatprep.mubr.f32.mxu0 0.0
  %352 = vmatmul.mubr.f32.gmra.mrb[0].mxu0 %v274
  %v353 = vpop.f32.mrb[0].mxu0
  %v354 = vadd.f32 %v257, %v353
  %v355 = vpop.f32.mrb[0].mxu0
  %356 = vmatprep.mubr.f32.mxu0 0.0
  %357 = vmatmul.mubr.f32.gmra.mrb[0].mxu0 %v277
  %v358 = vpop.f32.mrb[0].mxu0
  %v359 = vadd.f32 %v262, %v358
  %v360 = vpop.f32.mrb[0].mxu0
  %361 = vmatprep.mubr.f32.mxu0 0.0
  %362 = vmatmul.mubr.f32.gmra.mrb[0].mxu0 %v280
  %v363 = vpop.f32.mrb[0].mxu0
  %v364 = vadd.f32 %v267, %v363
  %v365 = vpop.f32.mrb[0].mxu0
  %366 = vdwg.mxu0
  %s367 = scalar_lea.vmem %s1, 32
  %v368 = vld [vmem:[%s367] sm:$0xff]
  %v369 = vld [vmem:[%s367 + $0x8] sm:$0xff]
  %v370 = vld [vmem:[%s367 + $0x10] sm:$0xff]
  %v371 = vld [vmem:[%s367 + $0x18] sm:$0xff]
  %v373 = vsel %vm66, %v368, 0
  %v376 = vsel %vm66, %v369, 0
  %v379 = vsel %vm66, %v370, 0
  %v382 = vsel %vm66, %v371, 0
  %384 = vmatprep.subr.mxu0 0.0
  %385 = vmatpush1.msra.mxu0 %v49
  %386 = vmatprep.subr.mxu0 0.0
  %387 = vmatpush1.msra.mxu0 %v50
  %388 = vmatprep.subr.mxu0 0.0
  %389 = vmatpush1.msra.mxu0 %v51
  %390 = vmatprep.subr.mxu0 0.0
  %391 = vmatpush1.msra.mxu0 %v52
  %392 = vmatprep.subr.mxu0 0.0
  %393 = vmatpush1.msra.mxu0 0.0
  %394 = vmatprep.subr.mxu0 0.0
  %395 = vmatpush1.msra.mxu0 0.0
  %396 = vmatprep.subr.mxu0 0.0
  %397 = vmatpush1.msra.mxu0 0.0
  %398 = vmatprep.subr.mxu0 0.0
  %399 = vmatpush1.msra.mxu0 0.0
  %400 = vmatprep.subr.mxu0 0.0
  %401 = vmatpush1.msra.mxu0 0.0
  %402 = vmatprep.subr.mxu0 0.0
  %403 = vmatpush1.msra.mxu0 0.0
  %404 = vmatprep.subr.mxu0 0.0
  %405 = vmatpush1.msra.mxu0 0.0
  %406 = vmatprep.subr.mxu0 0.0
  %407 = vmatpush1.msra.mxu0 0.0
  %408 = vmatprep.subr.mxu0 0.0
  %409 = vmatpush1.msra.mxu0 0.0
  %410 = vmatprep.subr.mxu0 0.0
  %411 = vmatpush1.msra.mxu0 0.0
  %412 = vmatprep.subr.mxu0 0.0
  %413 = vmatpush1.msra.mxu0 0.0
  %414 = vmatprep.subr.mxu0 0.0
  %415 = vmatpush1.msra.mxu0 0.0
  %416 = vmatprep.subr.mxu0 0.0
  %417 = vmatpush1.msra.mxu0 0.0
  %418 = vmatprep.subr.mxu0 0.0
  %419 = vmatpush1.msra.mxu0 0.0
  %420 = vmatprep.subr.mxu0 0.0
  %421 = vmatpush1.msra.mxu0 0.0
  %422 = vmatprep.subr.mxu0 0.0
  %423 = vmatpush1.msra.mxu0 0.0
  %424 = vmatprep.subr.mxu0 0.0
  %425 = vmatpush1.msra.mxu0 0.0
  %426 = vmatprep.subr.mxu0 0.0
  %427 = vmatpush1.msra.mxu0 0.0
  %428 = vmatprep.subr.mxu0 0.0
  %429 = vmatpush1.msra.mxu0 0.0
  %430 = vmatprep.subr.mxu0 0.0
  %431 = vmatpush1.msra.mxu0 0.0
  %432 = vmatprep.subr.mxu0 0.0
  %433 = vmatpush1.msra.mxu0 0.0
  %434 = vmatprep.subr.mxu0 0.0
  %435 = vmatpush1.msra.mxu0 0.0
  %436 = vmatprep.subr.mxu0 0.0
  %437 = vmatpush1.msra.mxu0 0.0
  %438 = vmatprep.subr.mxu0 0.0
  %439 = vmatpush1.msra.mxu0 0.0
  %440 = vmatprep.subr.mxu0 0.0
  %441 = vmatpush1.msra.mxu0 0.0
  %442 = vmatprep.subr.mxu0 0.0
  %443 = vmatpush1.msra.mxu0 0.0
  %444 = vmatprep.subr.mxu0 0.0
  %445 = vmatpush1.msra.mxu0 0.0
  %446 = vmatprep.subr.mxu0 0.0
  %447 = vmatpush1.msra.mxu0 0.0
  %448 = vmatprep.mubr.f32.mxu0 0.0
  %449 = vmatmul.mubr.f32.gmra.mrb[0].mxu0 %v373
  %v450 = vpop.f32.mrb[0].mxu0
  %v451 = vadd.f32 0.0, %v450
  %v452 = vpop.f32.mrb[0].mxu0
  %453 = vmatprep.mubr.f32.mxu0 0.0
  %454 = vmatmul.mubr.f32.gmra.mrb[0].mxu0 %v376
  %v455 = vpop.f32.mrb[0].mxu0
  %v456 = vadd.f32 0.0, %v455
  %v457 = vpop.f32.mrb[0].mxu0
  %458 = vmatprep.mubr.f32.mxu0 0.0
  %459 = vmatmul.mubr.f32.gmra.mrb[0].mxu0 %v379
  %v460 = vpop.f32.mrb[0].mxu0
  %v461 = vadd.f32 0.0, %v460
  %v462 = vpop.f32.mrb[0].mxu0
  %463 = vmatprep.mubr.f32.mxu0 0.0
  %464 = vmatmul.mubr.f32.gmra.mrb[0].mxu0 %v382
  %v465 = vpop.f32.mrb[0].mxu0
  %v466 = vadd.f32 0.0, %v465
  %v467 = vpop.f32.mrb[0].mxu0
  %468 = vdwg.mxu0
  %s469 = scalar_lea.vmem %s2, 128
  %v470 = vld [vmem:[%s469] sm:$0xff]
  %v471 = vld [vmem:[%s469 + $0x8] sm:$0xff]
  %v472 = vld [vmem:[%s469 + $0x10] sm:$0xff]
  %v473 = vld [vmem:[%s469 + $0x18] sm:$0xff]
  %v474 = vld [vmem:[%s469 + $0x20] sm:$0xff]
  %v475 = vld [vmem:[%s469 + $0x28] sm:$0xff]
  %v476 = vld [vmem:[%s469 + $0x30] sm:$0xff]
  %v477 = vld [vmem:[%s469 + $0x38] sm:$0xff]
  %v479 = vsel %vm172, %v451, 0
  %v482 = vsel %vm172, %v456, 0
  %v485 = vsel %vm172, %v461, 0
  %v488 = vsel %vm172, %v466, 0
  %490 = vmatprep.subr.mxu0 0.0
  %491 = vmatpush1.msra.mxu0 %v470
  %492 = vmatprep.subr.mxu0 0.0
  %493 = vmatpush1.msra.mxu0 %v471
  %494 = vmatprep.subr.mxu0 0.0
  %495 = vmatpush1.msra.mxu0 %v472
  %496 = vmatprep.subr.mxu0 0.0
  %497 = vmatpush1.msra.mxu0 %v473
  %498 = vmatprep.subr.mxu0 0.0
  %499 = vmatpush1.msra.mxu0 %v474
  %500 = vmatprep.subr.mxu0 0.0
  %501 = vmatpush1.msra.mxu0 %v475
  %502 = vmatprep.subr.mxu0 0.0
  %503 = vmatpush1.msra.mxu0 %v476
  %504 = vmatprep.subr.mxu0 0.0
  %505 = vmatpush1.msra.mxu0 %v477
  %506 = vmatprep.subr.mxu0 0.0
  %507 = vmatpush1.msra.mxu0 0.0
  %508 = vmatprep.subr.mxu0 0.0
  %509 = vmatpush1.msra.mxu0 0.0
  %510 = vmatprep.subr.mxu0 0.0
  %511 = vmatpush1.msra.mxu0 0.0
  %512 = vmatprep.subr.mxu0 0.0
  %513 = vmatpush1.msra.mxu0 0.0
  %514 = vmatprep.subr.mxu0 0.0
  %515 = vmatpush1.msra.mxu0 0.0
  %516 = vmatprep.subr.mxu0 0.0
  %517 = vmatpush1.msra.mxu0 0.0
  %518 = vmatprep.subr.mxu0 0.0
  %519 = vmatpush1.msra.mxu0 0.0
  %520 = vmatprep.subr.mxu0 0.0
  %521 = vmatpush1.msra.mxu0 0.0
  %522 = vmatprep.subr.mxu0 0.0
  %523 = vmatpush1.msra.mxu0 0.0
  %524 = vmatprep.subr.mxu0 0.0
  %525 = vmatpush1.msra.mxu0 0.0
  %526 = vmatprep.subr.mxu0 0.0
  %527 = vmatpush1.msra.mxu0 0.0
  %528 = vmatprep.subr.mxu0 0.0
  %529 = vmatpush1.msra.mxu0 0.0
  %530 = vmatprep.subr.mxu0 0.0
  %531 = vmatpush1.msra.mxu0 0.0
  %532 = vmatprep.subr.mxu0 0.0
  %533 = vmatpush1.msra.mxu0 0.0
  %534 = vmatprep.subr.mxu0 0.0
  %535 = vmatpush1.msra.mxu0 0.0
  %536 = vmatprep.subr.mxu0 0.0
  %537 = vmatpush1.msra.mxu0 0.0
  %538 = vmatprep.subr.mxu0 0.0
  %539 = vmatpush1.msra.mxu0 0.0
  %540 = vmatprep.subr.mxu0 0.0
  %541 = vmatpush1.msra.mxu0 0.0
  %542 = vmatprep.subr.mxu0 0.0
  %543 = vmatpush1.msra.mxu0 0.0
  %544 = vmatprep.subr.mxu0 0.0
  %545 = vmatpush1.msra.mxu0 0.0
  %546 = vmatprep.subr.mxu0 0.0
  %547 = vmatpush1.msra.mxu0 0.0
  %548 = vmatprep.subr.mxu0 0.0
  %549 = vmatpush1.msra.mxu0 0.0
  %550 = vmatprep.subr.mxu0 0.0
  %551 = vmatpush1.msra.mxu0 0.0
  %552 = vmatprep.subr.mxu0 0.0
  %553 = vmatpush1.msra.mxu0 0.0
  %554 = vmatprep.mubr.f32.mxu0 0.0
  %555 = vmatmul.mubr.f32.gmra.mrb[0].mxu0 %v479
  %v556 = vpop.f32.mrb[0].mxu0
  %v557 = vadd.f32 0.0, %v556
  %v558 = vpop.f32.mrb[0].mxu0
  %559 = vmatprep.mubr.f32.mxu0 0.0
  %560 = vmatmul.mubr.f32.gmra.mrb[0].mxu0 %v482
  %v561 = vpop.f32.mrb[0].mxu0
  %v562 = vadd.f32 0.0, %v561
  %v563 = vpop.f32.mrb[0].mxu0
  %564 = vmatprep.mubr.f32.mxu0 0.0
  %565 = vmatmul.mubr.f32.gmra.mrb[0].mxu0 %v485
  %v566 = vpop.f32.mrb[0].mxu0
  %v567 = vadd.f32 0.0, %v566
  %v568 = vpop.f32.mrb[0].mxu0
  %569 = vmatprep.mubr.f32.mxu0 0.0
  %570 = vmatmul.mubr.f32.gmra.mrb[0].mxu0 %v488
  %v571 = vpop.f32.mrb[0].mxu0
  %v572 = vadd.f32 0.0, %v571
  %v573 = vpop.f32.mrb[0].mxu0
  %574 = vdwg.mxu0
  %v575 = vadd.f32 %v349, %v557
  %v576 = vadd.f32 %v354, %v562
  %v577 = vadd.f32 %v359, %v567
  %v578 = vadd.f32 %v364, %v572
  %v579 = vld [vmem:[%s3] sm:$0x1]
  %v581 = vlaneseq
  %v582 = vshrl.u32 %v581, 7
  %v583 = vsub.s32 0, %v582
  %v584 = vrot.slane %v579, %v583
  %v586 = vadd.f32 %v575, %v584
  %v587 = vadd.f32 %v576, %v584
  %v588 = vadd.f32 %v577, %v584
  %v589 = vadd.f32 %v578, %v584
  %v590 = vmax.f32 %v586, 0.0
  %v591 = vmax.f32 %v587, 0.0
  %v592 = vmax.f32 %v588, 0.0
  %v593 = vmax.f32 %v589, 0.0
  %v594 = vld [vmem:[%s4] sm:$0xff]
  %v595 = vld [vmem:[%s4 + $0x8] sm:$0xff]
  %v597 = vsel %vm66, %v594, 0
  %v600 = vsel %vm66, %v595, 0
  %602 = vmatprep.subr.mxu0 0.0
  %603 = vmatpush1.msra.mxu0 %v590
  %604 = vmatprep.subr.mxu0 0.0
  %605 = vmatpush1.msra.mxu0 %v591
  %606 = vmatprep.subr.mxu0 0.0
  %607 = vmatpush1.msra.mxu0 %v592
  %608 = vmatprep.subr.mxu0 0.0
  %609 = vmatpush1.msra.mxu0 %v593
  %610 = vmatprep.subr.mxu0 0.0
  %611 = vmatpush1.msra.mxu0 0.0
  %612 = vmatprep.subr.mxu0 0.0
  %613 = vmatpush1.msra.mxu0 0.0
  %614 = vmatprep.subr.mxu0 0.0
  %615 = vmatpush1.msra.mxu0 0.0
  %616 = vmatprep.subr.mxu0 0.0
  %617 = vmatpush1.msra.mxu0 0.0
  %618 = vmatprep.subr.mxu0 0.0
  %619 = vmatpush1.msra.mxu0 0.0
  %620 = vmatprep.subr.mxu0 0.0
  %621 = vmatpush1.msra.mxu0 0.0
  %622 = vmatprep.subr.mxu0 0.0
  %623 = vmatpush1.msra.mxu0 0.0
  %624 = vmatprep.subr.mxu0 0.0
  %625 = vmatpush1.msra.mxu0 0.0
  %626 = vmatprep.subr.mxu0 0.0
  %627 = vmatpush1.msra.mxu0 0.0
  %628 = vmatprep.subr.mxu0 0.0
  %629 = vmatpush1.msra.mxu0 0.0
  %630 = vmatprep.subr.mxu0 0.0
  %631 = vmatpush1.msra.mxu0 0.0
  %632 = vmatprep.subr.mxu0 0.0
  %633 = vmatpush1.msra.mxu0 0.0
  %634 = vmatprep.subr.mxu0 0.0
  %635 = vmatpush1.msra.mxu0 0.0
  %636 = vmatprep.subr.mxu0 0.0
  %637 = vmatpush1.msra.mxu0 0.0
  %638 = vmatprep.subr.mxu0 0.0
  %639 = vmatpush1.msra.mxu0 0.0
  %640 = vmatprep.subr.mxu0 0.0
  %641 = vmatpush1.msra.mxu0 0.0
  %642 = vmatprep.subr.mxu0 0.0
  %643 = vmatpush1.msra.mxu0 0.0
  %644 = vmatprep.subr.mxu0 0.0
  %645 = vmatpush1.msra.mxu0 0.0
  %646 = vmatprep.subr.mxu0 0.0
  %647 = vmatpush1.msra.mxu0 0.0
  %648 = vmatprep.subr.mxu0 0.0
  %649 = vmatpush1.msra.mxu0 0.0
  %650 = vmatprep.subr.mxu0 0.0
  %651 = vmatpush1.msra.mxu0 0.0
  %652 = vmatprep.subr.mxu0 0.0
  %653 = vmatpush1.msra.mxu0 0.0
  %654 = vmatprep.subr.mxu0 0.0
  %655 = vmatpush1.msra.mxu0 0.0
  %656 = vmatprep.subr.mxu0 0.0
  %657 = vmatpush1.msra.mxu0 0.0
  %658 = vmatprep.subr.mxu0 0.0
  %659 = vmatpush1.msra.mxu0 0.0
  %660 = vmatprep.subr.mxu0 0.0
  %661 = vmatpush1.msra.mxu0 0.0
  %662 = vmatprep.subr.mxu0 0.0
  %663 = vmatpush1.msra.mxu0 0.0
  %664 = vmatprep.subr.mxu0 0.0
  %665 = vmatpush1.msra.mxu0 0.0
  %666 = vmatprep.mubr.f32.mxu0 0.0
  %667 = vmatmul.mubr.f32.gmra.mrb[0].mxu0 %v597
  %v668 = vpop.f32.mrb[0].mxu0
  %v669 = vadd.f32 0.0, %v668
  %v670 = vpop.f32.mrb[0].mxu0
  %671 = vmatprep.mubr.f32.mxu0 0.0
  %672 = vmatmul.mubr.f32.gmra.mrb[0].mxu0 %v600
  %v673 = vpop.f32.mrb[0].mxu0
  %v674 = vadd.f32 0.0, %v673
  %v675 = vpop.f32.mrb[0].mxu0
  %676 = vdwg.mxu0
  %s677 = scalar_lea.vmem %s4, 16
  %v678 = vld [vmem:[%s677] sm:$0xff]
  %v679 = vld [vmem:[%s677 + $0x8] sm:$0xff]
  %v681 = vsel %vm66, %v678, 0
  %v684 = vsel %vm66, %v679, 0
  %686 = vmatprep.subr.mxu0 0.0
  %687 = vmatpush1.msra.mxu0 %v590
  %688 = vmatprep.subr.mxu0 0.0
  %689 = vmatpush1.msra.mxu0 %v591
  %690 = vmatprep.subr.mxu0 0.0
  %691 = vmatpush1.msra.mxu0 %v592
  %692 = vmatprep.subr.mxu0 0.0
  %693 = vmatpush1.msra.mxu0 %v593
  %694 = vmatprep.subr.mxu0 0.0
  %695 = vmatpush1.msra.mxu0 0.0
  %696 = vmatprep.subr.mxu0 0.0
  %697 = vmatpush1.msra.mxu0 0.0
  %698 = vmatprep.subr.mxu0 0.0
  %699 = vmatpush1.msra.mxu0 0.0
  %700 = vmatprep.subr.mxu0 0.0
  %701 = vmatpush1.msra.mxu0 0.0
  %702 = vmatprep.subr.mxu0 0.0
  %703 = vmatpush1.msra.mxu0 0.0
  %704 = vmatprep.subr.mxu0 0.0
  %705 = vmatpush1.msra.mxu0 0.0
  %706 = vmatprep.subr.mxu0 0.0
  %707 = vmatpush1.msra.mxu0 0.0
  %708 = vmatprep.subr.mxu0 0.0
  %709 = vmatpush1.msra.mxu0 0.0
  %710 = vmatprep.subr.mxu0 0.0
  %711 = vmatpush1.msra.mxu0 0.0
  %712 = vmatprep.subr.mxu0 0.0
  %713 = vmatpush1.msra.mxu0 0.0
  %714 = vmatprep.subr.mxu0 0.0
  %715 = vmatpush1.msra.mxu0 0.0
  %716 = vmatprep.subr.mxu0 0.0
  %717 = vmatpush1.msra.mxu0 0.0
  %718 = vmatprep.subr.mxu0 0.0
  %719 = vmatpush1.msra.mxu0 0.0
  %720 = vmatprep.subr.mxu0 0.0
  %721 = vmatpush1.msra.mxu0 0.0
  %722 = vmatprep.subr.mxu0 0.0
  %723 = vmatpush1.msra.mxu0 0.0
  %724 = vmatprep.subr.mxu0 0.0
  %725 = vmatpush1.msra.mxu0 0.0
  %726 = vmatprep.subr.mxu0 0.0
  %727 = vmatpush1.msra.mxu0 0.0
  %728 = vmatprep.subr.mxu0 0.0
  %729 = vmatpush1.msra.mxu0 0.0
  %730 = vmatprep.subr.mxu0 0.0
  %731 = vmatpush1.msra.mxu0 0.0
  %732 = vmatprep.subr.mxu0 0.0
  %733 = vmatpush1.msra.mxu0 0.0
  %734 = vmatprep.subr.mxu0 0.0
  %735 = vmatpush1.msra.mxu0 0.0
  %736 = vmatprep.subr.mxu0 0.0
  %737 = vmatpush1.msra.mxu0 0.0
  %738 = vmatprep.subr.mxu0 0.0
  %739 = vmatpush1.msra.mxu0 0.0
  %740 = vmatprep.subr.mxu0 0.0
  %741 = vmatpush1.msra.mxu0 0.0
  %742 = vmatprep.subr.mxu0 0.0
  %743 = vmatpush1.msra.mxu0 0.0
  %744 = vmatprep.subr.mxu0 0.0
  %745 = vmatpush1.msra.mxu0 0.0
  %746 = vmatprep.subr.mxu0 0.0
  %747 = vmatpush1.msra.mxu0 0.0
  %748 = vmatprep.subr.mxu0 0.0
  %749 = vmatpush1.msra.mxu0 0.0
  %750 = vmatprep.mubr.f32.mxu0 0.0
  %751 = vmatmul.mubr.f32.gmra.mrb[0].mxu0 %v681
  %v752 = vpop.f32.mrb[0].mxu0
  %v753 = vadd.f32 0.0, %v752
  %v754 = vpop.f32.mrb[0].mxu0
  %755 = vmatprep.mubr.f32.mxu0 0.0
  %756 = vmatmul.mubr.f32.gmra.mrb[0].mxu0 %v684
  %v757 = vpop.f32.mrb[0].mxu0
  %v758 = vadd.f32 0.0, %v757
  %v759 = vpop.f32.mrb[0].mxu0
  %760 = vdwg.mxu0
  %v761 = vmax.f32 %v669, %v753
  %v762 = vmax.f32 %v674, %v758
  %v763 = vld [vmem:[%s5] sm:$0xff]
  %v764 = vld [vmem:[%s5 + $0x8] sm:$0xff]
  %v765 = vld [vmem:[%s5 + $0x10] sm:$0xff]
  %v766 = vld [vmem:[%s5 + $0x18] sm:$0xff]
  %v767 = vld [vmem:[%s5 + $0x20] sm:$0xff]
  %v768 = vld [vmem:[%s5 + $0x28] sm:$0xff]
  %v769 = vld [vmem:[%s5 + $0x30] sm:$0xff]
  %v770 = vld [vmem:[%s5 + $0x38] sm:$0xff]
  %v771 = vld [vmem:[%s5 + $0x40] sm:$0xff]
  %v772 = vld [vmem:[%s5 + $0x48] sm:$0xff]
  %v773 = vld [vmem:[%s5 + $0x50] sm:$0xff]
  %v774 = vld [vmem:[%s5 + $0x58] sm:$0xff]
  %v775 = vld [vmem:[%s5 + $0x60] sm:$0xff]
  %v776 = vld [vmem:[%s5 + $0x68] sm:$0xff]
  %v777 = vld [vmem:[%s5 + $0x70] sm:$0xff]
  %v778 = vld [vmem:[%s5 + $0x78] sm:$0xff]
  %779 = vmatprep.subr.mxu0 0.0
  %780 = vmatpush1.msra.mxu0 %v763
  %781 = vmatprep.subr.mxu0 0.0
  %782 = vmatpush1.msra.mxu0 %v764
  %783 = vmatprep.subr.mxu0 0.0
  %784 = vmatpush1.msra.mxu0 %v765
  %785 = vmatprep.subr.mxu0 0.0
  %786 = vmatpush1.msra.mxu0 %v766
  %787 = vmatprep.subr.mxu0 0.0
  %788 = vmatpush1.msra.mxu0 %v767
  %789 = vmatprep.subr.mxu0 0.0
  %790 = vmatpush1.msra.mxu0 %v768
  %791 = vmatprep.subr.mxu0 0.0
  %792 = vmatpush1.msra.mxu0 %v769
  %793 = vmatprep.subr.mxu0 0.0
  %794 = vmatpush1.msra.mxu0 %v770
  %795 = vmatprep.subr.mxu0 0.0
  %796 = vmatpush1.msra.mxu0 %v771
  %797 = vmatprep.subr.mxu0 0.0
  %798 = vmatpush1.msra.mxu0 %v772
  %799 = vmatprep.subr.mxu0 0.0
  %800 = vmatpush1.msra.mxu0 %v773
  %801 = vmatprep.subr.mxu0 0.0
  %802 = vmatpush1.msra.mxu0 %v774
  %803 = vmatprep.subr.mxu0 0.0
  %804 = vmatpush1.msra.mxu0 %v775
  %805 = vmatprep.subr.mxu0 0.0
  %806 = vmatpush1.msra.mxu0 %v776
  %807 = vmatprep.subr.mxu0 0.0
  %808 = vmatpush1.msra.mxu0 %v777
  %809 = vmatprep.subr.mxu0 0.0
  %810 = vmatpush1.msra.mxu0 %v778
  %811 = vmatprep.subr.mxu0 0.0
  %812 = vmatpush1.msra.mxu0 0.0
  %813 = vmatprep.subr.mxu0 0.0
  %814 = vmatpush1.msra.mxu0 0.0
  %815 = vmatprep.subr.mxu0 0.0
  %816 = vmatpush1.msra.mxu0 0.0
  %817 = vmatprep.subr.mxu0 0.0
  %818 = vmatpush1.msra.mxu0 0.0
  %819 = vmatprep.subr.mxu0 0.0
  %820 = vmatpush1.msra.mxu0 0.0
  %821 = vmatprep.subr.mxu0 0.0
  %822 = vmatpush1.msra.mxu0 0.0
  %823 = vmatprep.subr.mxu0 0.0
  %824 = vmatpush1.msra.mxu0 0.0
  %825 = vmatprep.subr.mxu0 0.0
  %826 = vmatpush1.msra.mxu0 0.0
  %827 = vmatprep.subr.mxu0 0.0
  %828 = vmatpush1.msra.mxu0 0.0
  %829 = vmatprep.subr.mxu0 0.0
  %830 = vmatpush1.msra.mxu0 0.0
  %831 = vmatprep.subr.mxu0 0.0
  %832 = vmatpush1.msra.mxu0 0.0
  %833 = vmatprep.subr.mxu0 0.0
  %834 = vmatpush1.msra.mxu0 0.0
  %835 = vmatprep.subr.mxu0 0.0
  %836 = vmatpush1.msra.mxu0 0.0
  %837 = vmatprep.subr.mxu0 0.0
  %838 = vmatpush1.msra.mxu0 0.0
  %839 = vmatprep.subr.mxu0 0.0
  %840 = vmatpush1.msra.mxu0 0.0
  %841 = vmatprep.subr.mxu0 0.0
  %842 = vmatpush1.msra.mxu0 0.0
  %843 = vmatprep.mubr.f32.mxu0 0.0
  %844 = vmatmul.mubr.f32.gmra.mrb[0].mxu0 %v761
  %v845 = vpop.f32.mrb[0].mxu0
  %v846 = vadd.f32 0.0, %v845
  %v847 = vpop.f32.mrb[0].mxu0
  %848 = vmatprep.mubr.f32.mxu0 0.0
  %849 = vmatmul.mubr.f32.gmra.mrb[0].mxu0 %v762
  %v850 = vpop.f32.mrb[0].mxu0
  %v851 = vadd.f32 0.0, %v850
  %v852 = vpop.f32.mrb[0].mxu0
  %853 = vdwg.mxu0
  %s854 = scalar_lea.vmem %s5, 128
  %v855 = vld [vmem:[%s854] sm:$0xff]
  %v856 = vld [vmem:[%s854 + $0x8] sm:$0xff]
  %v857 = vld [vmem:[%s854 + $0x10] sm:$0xff]
  %v858 = vld [vmem:[%s854 + $0x18] sm:$0xff]
  %v859 = vld [vmem:[%s854 + $0x20] sm:$0xff]
  %v860 = vld [vmem:[%s854 + $0x28] sm:$0xff]
  %v861 = vld [vmem:[%s854 + $0x30] sm:$0xff]
  %v862 = vld [vmem:[%s854 + $0x38] sm:$0xff]
  %v863 = vld [vmem:[%s854 + $0x40] sm:$0xff]
  %v864 = vld [vmem:[%s854 + $0x48] sm:$0xff]
  %v865 = vld [vmem:[%s854 + $0x50] sm:$0xff]
  %v866 = vld [vmem:[%s854 + $0x58] sm:$0xff]
  %v867 = vld [vmem:[%s854 + $0x60] sm:$0xff]
  %v868 = vld [vmem:[%s854 + $0x68] sm:$0xff]
  %v869 = vld [vmem:[%s854 + $0x70] sm:$0xff]
  %v870 = vld [vmem:[%s854 + $0x78] sm:$0xff]
  %871 = vmatprep.subr.mxu0 0.0
  %872 = vmatpush1.msra.mxu0 %v855
  %873 = vmatprep.subr.mxu0 0.0
  %874 = vmatpush1.msra.mxu0 %v856
  %875 = vmatprep.subr.mxu0 0.0
  %876 = vmatpush1.msra.mxu0 %v857
  %877 = vmatprep.subr.mxu0 0.0
  %878 = vmatpush1.msra.mxu0 %v858
  %879 = vmatprep.subr.mxu0 0.0
  %880 = vmatpush1.msra.mxu0 %v859
  %881 = vmatprep.subr.mxu0 0.0
  %882 = vmatpush1.msra.mxu0 %v860
  %883 = vmatprep.subr.mxu0 0.0
  %884 = vmatpush1.msra.mxu0 %v861
  %885 = vmatprep.subr.mxu0 0.0
  %886 = vmatpush1.msra.mxu0 %v862
  %887 = vmatprep.subr.mxu0 0.0
  %888 = vmatpush1.msra.mxu0 %v863
  %889 = vmatprep.subr.mxu0 0.0
  %890 = vmatpush1.msra.mxu0 %v864
  %891 = vmatprep.subr.mxu0 0.0
  %892 = vmatpush1.msra.mxu0 %v865
  %893 = vmatprep.subr.mxu0 0.0
  %894 = vmatpush1.msra.mxu0 %v866
  %895 = vmatprep.subr.mxu0 0.0
  %896 = vmatpush1.msra.mxu0 %v867
  %897 = vmatprep.subr.mxu0 0.0
  %898 = vmatpush1.msra.mxu0 %v868
  %899 = vmatprep.subr.mxu0 0.0
  %900 = vmatpush1.msra.mxu0 %v869
  %901 = vmatprep.subr.mxu0 0.0
  %902 = vmatpush1.msra.mxu0 %v870
  %903 = vmatprep.subr.mxu0 0.0
  %904 = vmatpush1.msra.mxu0 0.0
  %905 = vmatprep.subr.mxu0 0.0
  %906 = vmatpush1.msra.mxu0 0.0
  %907 = vmatprep.subr.mxu0 0.0
  %908 = vmatpush1.msra.mxu0 0.0
  %909 = vmatprep.subr.mxu0 0.0
  %910 = vmatpush1.msra.mxu0 0.0
  %911 = vmatprep.subr.mxu0 0.0
  %912 = vmatpush1.msra.mxu0 0.0
  %913 = vmatprep.subr.mxu0 0.0
  %914 = vmatpush1.msra.mxu0 0.0
  %915 = vmatprep.subr.mxu0 0.0
  %916 = vmatpush1.msra.mxu0 0.0
  %917 = vmatprep.subr.mxu0 0.0
  %918 = vmatpush1.msra.mxu0 0.0
  %919 = vmatprep.subr.mxu0 0.0
  %920 = vmatpush1.msra.mxu0 0.0
  %921 = vmatprep.subr.mxu0 0.0
  %922 = vmatpush1.msra.mxu0 0.0
  %923 = vmatprep.subr.mxu0 0.0
  %924 = vmatpush1.msra.mxu0 0.0
  %925 = vmatprep.subr.mxu0 0.0
  %926 = vmatpush1.msra.mxu0 0.0
  %927 = vmatprep.subr.mxu0 0.0
  %928 = vmatpush1.msra.mxu0 0.0
  %929 = vmatprep.subr.mxu0 0.0
  %930 = vmatpush1.msra.mxu0 0.0
  %931 = vmatprep.subr.mxu0 0.0
  %932 = vmatpush1.msra.mxu0 0.0
  %933 = vmatprep.subr.mxu0 0.0
  %934 = vmatpush1.msra.mxu0 0.0
  %935 = vmatprep.mubr.f32.mxu0 0.0
  %936 = vmatmul.mubr.f32.gmra.mrb[0].mxu0 %v761
  %v937 = vpop.f32.mrb[0].mxu0
  %v938 = vadd.f32 0.0, %v937
  %v939 = vpop.f32.mrb[0].mxu0
  %940 = vmatprep.mubr.f32.mxu0 0.0
  %941 = vmatmul.mubr.f32.gmra.mrb[0].mxu0 %v762
  %v942 = vpop.f32.mrb[0].mxu0
  %v943 = vadd.f32 0.0, %v942
  %v944 = vpop.f32.mrb[0].mxu0
  %945 = vdwg.mxu0
  %v946 = vmax.f32 %v846, %v938
  %v947 = vmax.f32 %v851, %v943
  %s948 = scalar_lea.vmem %s7, 64
  %v949 = vld [vmem:[%s948] sm:$0xff]
  %v950 = vld [vmem:[%s948 + $0x8] sm:$0xff]
  %v951 = vld [vmem:[%s948 + $0x10] sm:$0xff]
  %v952 = vld [vmem:[%s948 + $0x18] sm:$0xff]
  %v953 = vld [vmem:[%s948 + $0x20] sm:$0xff]
  %v954 = vld [vmem:[%s948 + $0x28] sm:$0xff]
  %v955 = vld [vmem:[%s948 + $0x30] sm:$0xff]
  %v956 = vld [vmem:[%s948 + $0x38] sm:$0xff]
  %v957 = vld [vmem:[%s6] sm:$0xff]
  %v958 = vld [vmem:[%s6 + $0x8] sm:$0xff]
  %vm959 = vcmask 130048
  %v961 = vsel %vm959, %v957, 0
  %v964 = vsel %vm959, %v958, 0
  %966 = vmatprep.subr.mxu0 0.0
  %967 = vmatpush1.msra.mxu0 %v946
  %968 = vmatprep.subr.mxu0 0.0
  %969 = vmatpush1.msra.mxu0 %v947
  %970 = vmatprep.subr.mxu0 0.0
  %971 = vmatpush1.msra.mxu0 0.0
  %972 = vmatprep.subr.mxu0 0.0
  %973 = vmatpush1.msra.mxu0 0.0
  %974 = vmatprep.subr.mxu0 0.0
  %975 = vmatpush1.msra.mxu0 0.0
  %976 = vmatprep.subr.mxu0 0.0
  %977 = vmatpush1.msra.mxu0 0.0
  %978 = vmatprep.subr.mxu0 0.0
  %979 = vmatpush1.msra.mxu0 0.0
  %980 = vmatprep.subr.mxu0 0.0
  %981 = vmatpush1.msra.mxu0 0.0
  %982 = vmatprep.subr.mxu0 0.0
  %983 = vmatpush1.msra.mxu0 0.0
  %984 = vmatprep.subr.mxu0 0.0
  %985 = vmatpush1.msra.mxu0 0.0
  %986 = vmatprep.subr.mxu0 0.0
  %987 = vmatpush1.msra.mxu0 0.0
  %988 = vmatprep.subr.mxu0 0.0
  %989 = vmatpush1.msra.mxu0 0.0
  %990 = vmatprep.subr.mxu0 0.0
  %991 = vmatpush1.msra.mxu0 0.0
  %992 = vmatprep.subr.mxu0 0.0
  %993 = vmatpush1.msra.mxu0 0.0
  %994 = vmatprep.subr.mxu0 0.0
  %995 = vmatpush1.msra.mxu0 0.0
  %996 = vmatprep.subr.mxu0 0.0
  %997 = vmatpush1.msra.mxu0 0.0
  %998 = vmatprep.subr.mxu0 0.0
  %999 = vmatpush1.msra.mxu0 0.0
  %1000 = vmatprep.subr.mxu0 0.0
  %1001 = vmatpush1.msra.mxu0 0.0
  %1002 = vmatprep.subr.mxu0 0.0
  %1003 = vmatpush1.msra.mxu0 0.0
  %1004 = vmatprep.subr.mxu0 0.0
  %1005 = vmatpush1.msra.mxu0 0.0
  %1006 = vmatprep.subr.mxu0 0.0
  %1007 = vmatpush1.msra.mxu0 0.0
  %1008 = vmatprep.subr.mxu0 0.0
  %1009 = vmatpush1.msra.mxu0 0.0
  %1010 = vmatprep.subr.mxu0 0.0
  %1011 = vmatpush1.msra.mxu0 0.0
  %1012 = vmatprep.subr.mxu0 0.0
  %1013 = vmatpush1.msra.mxu0 0.0
  %1014 = vmatprep.subr.mxu0 0.0
  %1015 = vmatpush1.msra.mxu0 0.0
  %1016 = vmatprep.subr.mxu0 0.0
  %1017 = vmatpush1.msra.mxu0 0.0
  %1018 = vmatprep.subr.mxu0 0.0
  %1019 = vmatpush1.msra.mxu0 0.0
  %1020 = vmatprep.subr.mxu0 0.0
  %1021 = vmatpush1.msra.mxu0 0.0
  %1022 = vmatprep.subr.mxu0 0.0
  %1023 = vmatpush1.msra.mxu0 0.0
  %1024 = vmatprep.subr.mxu0 0.0
  %1025 = vmatpush1.msra.mxu0 0.0
  %1026 = vmatprep.subr.mxu0 0.0
  %1027 = vmatpush1.msra.mxu0 0.0
  %1028 = vmatprep.subr.mxu0 0.0
  %1029 = vmatpush1.msra.mxu0 0.0
  %1030 = vmatprep.mubr.f32.mxu0 0.0
  %1031 = vmatmul.mubr.f32.gmra.mrb[0].mxu0 %v961
  %v1032 = vpop.f32.mrb[0].mxu0
  %v1033 = vadd.f32 0.0, %v1032
  %v1034 = vpop.f32.mrb[0].mxu0
  %1035 = vmatprep.mubr.f32.mxu0 0.0
  %1036 = vmatmul.mubr.f32.gmra.mrb[0].mxu0 %v964
  %v1037 = vpop.f32.mrb[0].mxu0
  %v1038 = vadd.f32 0.0, %v1037
  %v1039 = vpop.f32.mrb[0].mxu0
  %1040 = vdwg.mxu0
  %v1041 = vld [vmem:[%s7] sm:$0xff]
  %v1042 = vld [vmem:[%s7 + $0x8] sm:$0xff]
  %v1043 = vld [vmem:[%s7 + $0x10] sm:$0xff]
  %v1044 = vld [vmem:[%s7 + $0x18] sm:$0xff]
  %v1045 = vld [vmem:[%s7 + $0x20] sm:$0xff]
  %v1046 = vld [vmem:[%s7 + $0x28] sm:$0xff]
  %v1047 = vld [vmem:[%s7 + $0x30] sm:$0xff]
  %v1048 = vld [vmem:[%s7 + $0x38] sm:$0xff]
  %v1050 = vsel %vm172, %v1033, 0
  %v1053 = vsel %vm172, %v1038, 0
  %1055 = vmatprep.subr.mxu0 0.0
  %1056 = vmatpush1.msra.mxu0 %v1041
  %1057 = vmatprep.subr.mxu0 0.0
  %1058 = vmatpush1.msra.mxu0 %v1042
  %1059 = vmatprep.subr.mxu0 0.0
  %1060 = vmatpush1.msra.mxu0 %v1043
  %1061 = vmatprep.subr.mxu0 0.0
  %1062 = vmatpush1.msra.mxu0 %v1044
  %1063 = vmatprep.subr.mxu0 0.0
  %1064 = vmatpush1.msra.mxu0 %v1045
  %1065 = vmatprep.subr.mxu0 0.0
  %1066 = vmatpush1.msra.mxu0 %v1046
  %1067 = vmatprep.subr.mxu0 0.0
  %1068 = vmatpush1.msra.mxu0 %v1047
  %1069 = vmatprep.subr.mxu0 0.0
  %1070 = vmatpush1.msra.mxu0 %v1048
  %1071 = vmatprep.subr.mxu0 0.0
  %1072 = vmatpush1.msra.mxu0 0.0
  %1073 = vmatprep.subr.mxu0 0.0
  %1074 = vmatpush1.msra.mxu0 0.0
  %1075 = vmatprep.subr.mxu0 0.0
  %1076 = vmatpush1.msra.mxu0 0.0
  %1077 = vmatprep.subr.mxu0 0.0
  %1078 = vmatpush1.msra.mxu0 0.0
  %1079 = vmatprep.subr.mxu0 0.0
  %1080 = vmatpush1.msra.mxu0 0.0
  %1081 = vmatprep.subr.mxu0 0.0
  %1082 = vmatpush1.msra.mxu0 0.0
  %1083 = vmatprep.subr.mxu0 0.0
  %1084 = vmatpush1.msra.mxu0 0.0
  %1085 = vmatprep.subr.mxu0 0.0
  %1086 = vmatpush1.msra.mxu0 0.0
  %1087 = vmatprep.subr.mxu0 0.0
  %1088 = vmatpush1.msra.mxu0 0.0
  %1089 = vmatprep.subr.mxu0 0.0
  %1090 = vmatpush1.msra.mxu0 0.0
  %1091 = vmatprep.subr.mxu0 0.0
  %1092 = vmatpush1.msra.mxu0 0.0
  %1093 = vmatprep.subr.mxu0 0.0
  %1094 = vmatpush1.msra.mxu0 0.0
  %1095 = vmatprep.subr.mxu0 0.0
  %1096 = vmatpush1.msra.mxu0 0.0
  %1097 = vmatprep.subr.mxu0 0.0
  %1098 = vmatpush1.msra.mxu0 0.0
  %1099 = vmatprep.subr.mxu0 0.0
  %1100 = vmatpush1.msra.mxu0 0.0
  %1101 = vmatprep.subr.mxu0 0.0
  %1102 = vmatpush1.msra.mxu0 0.0
  %1103 = vmatprep.subr.mxu0 0.0
  %1104 = vmatpush1.msra.mxu0 0.0
  %1105 = vmatprep.subr.mxu0 0.0
  %1106 = vmatpush1.msra.mxu0 0.0
  %1107 = vmatprep.subr.mxu0 0.0
  %1108 = vmatpush1.msra.mxu0 0.0
  %1109 = vmatprep.subr.mxu0 0.0
  %1110 = vmatpush1.msra.mxu0 0.0
  %1111 = vmatprep.subr.mxu0 0.0
  %1112 = vmatpush1.msra.mxu0 0.0
  %1113 = vmatprep.subr.mxu0 0.0
  %1114 = vmatpush1.msra.mxu0 0.0
  %1115 = vmatprep.subr.mxu0 0.0
  %1116 = vmatpush1.msra.mxu0 0.0
  %1117 = vmatprep.subr.mxu0 0.0
  %1118 = vmatpush1.msra.mxu0 0.0
  %1119 = vmatprep.mubr.f32.mxu0 0.0
  %1120 = vmatmul.mubr.f32.gmra.mrb[0].mxu0 %v1050
  %v1121 = vpop.f32.mrb[0].mxu0
  %v1122 = vadd.f32 0.0, %v1121
  %v1123 = vpop.f32.mrb[0].mxu0
  %1124 = vmatprep.mubr.f32.mxu0 0.0
  %1125 = vmatmul.mubr.f32.gmra.mrb[0].mxu0 %v1053
  %v1126 = vpop.f32.mrb[0].mxu0
  %v1127 = vadd.f32 0.0, %v1126
  %v1128 = vpop.f32.mrb[0].mxu0
  %1129 = vdwg.mxu0
  %v1131 = vsel %vm172, %v946, 0
  %v1134 = vsel %vm172, %v947, 0
  %1136 = vmatprep.subr.mxu0 0.0
  %1137 = vmatpush1.msra.mxu0 %v949
  %1138 = vmatprep.subr.mxu0 0.0
  %1139 = vmatpush1.msra.mxu0 %v950
  %1140 = vmatprep.subr.mxu0 0.0
  %1141 = vmatpush1.msra.mxu0 %v951
  %1142 = vmatprep.subr.mxu0 0.0
  %1143 = vmatpush1.msra.mxu0 %v952
  %1144 = vmatprep.subr.mxu0 0.0
  %1145 = vmatpush1.msra.mxu0 %v953
  %1146 = vmatprep.subr.mxu0 0.0
  %1147 = vmatpush1.msra.mxu0 %v954
  %1148 = vmatprep.subr.mxu0 0.0
  %1149 = vmatpush1.msra.mxu0 %v955
  %1150 = vmatprep.subr.mxu0 0.0
  %1151 = vmatpush1.msra.mxu0 %v956
  %1152 = vmatprep.subr.mxu0 0.0
  %1153 = vmatpush1.msra.mxu0 0.0
  %1154 = vmatprep.subr.mxu0 0.0
  %1155 = vmatpush1.msra.mxu0 0.0
  %1156 = vmatprep.subr.mxu0 0.0
  %1157 = vmatpush1.msra.mxu0 0.0
  %1158 = vmatprep.subr.mxu0 0.0
  %1159 = vmatpush1.msra.mxu0 0.0
  %1160 = vmatprep.subr.mxu0 0.0
  %1161 = vmatpush1.msra.mxu0 0.0
  %1162 = vmatprep.subr.mxu0 0.0
  %1163 = vmatpush1.msra.mxu0 0.0
  %1164 = vmatprep.subr.mxu0 0.0
  %1165 = vmatpush1.msra.mxu0 0.0
  %1166 = vmatprep.subr.mxu0 0.0
  %1167 = vmatpush1.msra.mxu0 0.0
  %1168 = vmatprep.subr.mxu0 0.0
  %1169 = vmatpush1.msra.mxu0 0.0
  %1170 = vmatprep.subr.mxu0 0.0
  %1171 = vmatpush1.msra.mxu0 0.0
  %1172 = vmatprep.subr.mxu0 0.0
  %1173 = vmatpush1.msra.mxu0 0.0
  %1174 = vmatprep.subr.mxu0 0.0
  %1175 = vmatpush1.msra.mxu0 0.0
  %1176 = vmatprep.subr.mxu0 0.0
  %1177 = vmatpush1.msra.mxu0 0.0
  %1178 = vmatprep.subr.mxu0 0.0
  %1179 = vmatpush1.msra.mxu0 0.0
  %1180 = vmatprep.subr.mxu0 0.0
  %1181 = vmatpush1.msra.mxu0 0.0
  %1182 = vmatprep.subr.mxu0 0.0
  %1183 = vmatpush1.msra.mxu0 0.0
  %1184 = vmatprep.subr.mxu0 0.0
  %1185 = vmatpush1.msra.mxu0 0.0
  %1186 = vmatprep.subr.mxu0 0.0
  %1187 = vmatpush1.msra.mxu0 0.0
  %1188 = vmatprep.subr.mxu0 0.0
  %1189 = vmatpush1.msra.mxu0 0.0
  %1190 = vmatprep.subr.mxu0 0.0
  %1191 = vmatpush1.msra.mxu0 0.0
  %1192 = vmatprep.subr.mxu0 0.0
  %1193 = vmatpush1.msra.mxu0 0.0
  %1194 = vmatprep.subr.mxu0 0.0
  %1195 = vmatpush1.msra.mxu0 0.0
  %1196 = vmatprep.subr.mxu0 0.0
  %1197 = vmatpush1.msra.mxu0 0.0
  %1198 = vmatprep.subr.mxu0 0.0
  %1199 = vmatpush1.msra.mxu0 0.0
  %1200 = vmatprep.mubr.f32.mxu0 0.0
  %1201 = vmatmul.mubr.f32.gmra.mrb[0].mxu0 %v1131
  %v1202 = vpop.f32.mrb[0].mxu0
  %v1203 = vadd.f32 %v1122, %v1202
  %v1204 = vpop.f32.mrb[0].mxu0
  %1205 = vmatprep.mubr.f32.mxu0 0.0
  %1206 = vmatmul.mubr.f32.gmra.mrb[0].mxu0 %v1134
  %v1207 = vpop.f32.mrb[0].mxu0
  %v1208 = vadd.f32 %v1127, %v1207
  %v1209 = vpop.f32.mrb[0].mxu0
  %1210 = vdwg.mxu0
  %s1211 = scalar_lea.vmem %s6, 16
  %v1212 = vld [vmem:[%s1211] sm:$0xff]
  %v1213 = vld [vmem:[%s1211 + $0x8] sm:$0xff]
  %v1215 = vsel %vm959, %v1212, 0
  %v1218 = vsel %vm959, %v1213, 0
  %1220 = vmatprep.subr.mxu0 0.0
  %1221 = vmatpush1.msra.mxu0 %v946
  %1222 = vmatprep.subr.mxu0 0.0
  %1223 = vmatpush1.msra.mxu0 %v947
  %1224 = vmatprep.subr.mxu0 0.0
  %1225 = vmatpush1.msra.mxu0 0.0
  %1226 = vmatprep.subr.mxu0 0.0
  %1227 = vmatpush1.msra.mxu0 0.0
  %1228 = vmatprep.subr.mxu0 0.0
  %1229 = vmatpush1.msra.mxu0 0.0
  %1230 = vmatprep.subr.mxu0 0.0
  %1231 = vmatpush1.msra.mxu0 0.0
  %1232 = vmatprep.subr.mxu0 0.0
  %1233 = vmatpush1.msra.mxu0 0.0
  %1234 = vmatprep.subr.mxu0 0.0
  %1235 = vmatpush1.msra.mxu0 0.0
  %1236 = vmatprep.subr.mxu0 0.0
  %1237 = vmatpush1.msra.mxu0 0.0
  %1238 = vmatprep.subr.mxu0 0.0
  %1239 = vmatpush1.msra.mxu0 0.0
  %1240 = vmatprep.subr.mxu0 0.0
  %1241 = vmatpush1.msra.mxu0 0.0
  %1242 = vmatprep.subr.mxu0 0.0
  %1243 = vmatpush1.msra.mxu0 0.0
  %1244 = vmatprep.subr.mxu0 0.0
  %1245 = vmatpush1.msra.mxu0 0.0
  %1246 = vmatprep.subr.mxu0 0.0
  %1247 = vmatpush1.msra.mxu0 0.0
  %1248 = vmatprep.subr.mxu0 0.0
  %1249 = vmatpush1.msra.mxu0 0.0
  %1250 = vmatprep.subr.mxu0 0.0
  %1251 = vmatpush1.msra.mxu0 0.0
  %1252 = vmatprep.subr.mxu0 0.0
  %1253 = vmatpush1.msra.mxu0 0.0
  %1254 = vmatprep.subr.mxu0 0.0
  %1255 = vmatpush1.msra.mxu0 0.0
  %1256 = vmatprep.subr.mxu0 0.0
  %1257 = vmatpush1.msra.mxu0 0.0
  %1258 = vmatprep.subr.mxu0 0.0
  %1259 = vmatpush1.msra.mxu0 0.0
  %1260 = vmatprep.subr.mxu0 0.0
  %1261 = vmatpush1.msra.mxu0 0.0
  %1262 = vmatprep.subr.mxu0 0.0
  %1263 = vmatpush1.msra.mxu0 0.0
  %1264 = vmatprep.subr.mxu0 0.0
  %1265 = vmatpush1.msra.mxu0 0.0
  %1266 = vmatprep.subr.mxu0 0.0
  %1267 = vmatpush1.msra.mxu0 0.0
  %1268 = vmatprep.subr.mxu0 0.0
  %1269 = vmatpush1.msra.mxu0 0.0
  %1270 = vmatprep.subr.mxu0 0.0
  %1271 = vmatpush1.msra.mxu0 0.0
  %1272 = vmatprep.subr.mxu0 0.0
  %1273 = vmatpush1.msra.mxu0 0.0
  %1274 = vmatprep.subr.mxu0 0.0
  %1275 = vmatpush1.msra.mxu0 0.0
  %1276 = vmatprep.subr.mxu0 0.0
  %1277 = vmatpush1.msra.mxu0 0.0
  %1278 = vmatprep.subr.mxu0 0.0
  %1279 = vmatpush1.msra.mxu0 0.0
  %1280 = vmatprep.subr.mxu0 0.0
  %1281 = vmatpush1.msra.mxu0 0.0
  %1282 = vmatprep.subr.mxu0 0.0
  %1283 = vmatpush1.msra.mxu0 0.0
  %1284 = vmatprep.mubr.f32.mxu0 0.0
  %1285 = vmatmul.mubr.f32.gmra.mrb[0].mxu0 %v1215
  %v1286 = vpop.f32.mrb[0].mxu0
  %v1287 = vadd.f32 0.0, %v1286
  %v1288 = vpop.f32.mrb[0].mxu0
  %1289 = vmatprep.mubr.f32.mxu0 0.0
  %1290 = vmatmul.mubr.f32.gmra.mrb[0].mxu0 %v1218
  %v1291 = vpop.f32.mrb[0].mxu0
  %v1292 = vadd.f32 0.0, %v1291
  %v1293 = vpop.f32.mrb[0].mxu0
  %1294 = vdwg.mxu0
  %s1295 = scalar_lea.vmem %s7, 128
  %v1296 = vld [vmem:[%s1295] sm:$0xff]
  %v1297 = vld [vmem:[%s1295 + $0x8] sm:$0xff]
  %v1298 = vld [vmem:[%s1295 + $0x10] sm:$0xff]
  %v1299 = vld [vmem:[%s1295 + $0x18] sm:$0xff]
  %v1300 = vld [vmem:[%s1295 + $0x20] sm:$0xff]
  %v1301 = vld [vmem:[%s1295 + $0x28] sm:$0xff]
  %v1302 = vld [vmem:[%s1295 + $0x30] sm:$0xff]
  %v1303 = vld [vmem:[%s1295 + $0x38] sm:$0xff]
  %v1305 = vsel %vm172, %v1287, 0
  %v1308 = vsel %vm172, %v1292, 0
  %1310 = vmatprep.subr.mxu0 0.0
  %1311 = vmatpush1.msra.mxu0 %v1296
  %1312 = vmatprep.subr.mxu0 0.0
  %1313 = vmatpush1.msra.mxu0 %v1297
  %1314 = vmatprep.subr.mxu0 0.0
  %1315 = vmatpush1.msra.mxu0 %v1298
  %1316 = vmatprep.subr.mxu0 0.0
  %1317 = vmatpush1.msra.mxu0 %v1299
  %1318 = vmatprep.subr.mxu0 0.0
  %1319 = vmatpush1.msra.mxu0 %v1300
  %1320 = vmatprep.subr.mxu0 0.0
  %1321 = vmatpush1.msra.mxu0 %v1301
  %1322 = vmatprep.subr.mxu0 0.0
  %1323 = vmatpush1.msra.mxu0 %v1302
  %1324 = vmatprep.subr.mxu0 0.0
  %1325 = vmatpush1.msra.mxu0 %v1303
  %1326 = vmatprep.subr.mxu0 0.0
  %1327 = vmatpush1.msra.mxu0 0.0
  %1328 = vmatprep.subr.mxu0 0.0
  %1329 = vmatpush1.msra.mxu0 0.0
  %1330 = vmatprep.subr.mxu0 0.0
  %1331 = vmatpush1.msra.mxu0 0.0
  %1332 = vmatprep.subr.mxu0 0.0
  %1333 = vmatpush1.msra.mxu0 0.0
  %1334 = vmatprep.subr.mxu0 0.0
  %1335 = vmatpush1.msra.mxu0 0.0
  %1336 = vmatprep.subr.mxu0 0.0
  %1337 = vmatpush1.msra.mxu0 0.0
  %1338 = vmatprep.subr.mxu0 0.0
  %1339 = vmatpush1.msra.mxu0 0.0
  %1340 = vmatprep.subr.mxu0 0.0
  %1341 = vmatpush1.msra.mxu0 0.0
  %1342 = vmatprep.subr.mxu0 0.0
  %1343 = vmatpush1.msra.mxu0 0.0
  %1344 = vmatprep.subr.mxu0 0.0
  %1345 = vmatpush1.msra.mxu0 0.0
  %1346 = vmatprep.subr.mxu0 0.0
  %1347 = vmatpush1.msra.mxu0 0.0
  %1348 = vmatprep.subr.mxu0 0.0
  %1349 = vmatpush1.msra.mxu0 0.0
  %1350 = vmatprep.subr.mxu0 0.0
  %1351 = vmatpush1.msra.mxu0 0.0
  %1352 = vmatprep.subr.mxu0 0.0
  %1353 = vmatpush1.msra.mxu0 0.0
  %1354 = vmatprep.subr.mxu0 0.0
  %1355 = vmatpush1.msra.mxu0 0.0
  %1356 = vmatprep.subr.mxu0 0.0
  %1357 = vmatpush1.msra.mxu0 0.0
  %1358 = vmatprep.subr.mxu0 0.0
  %1359 = vmatpush1.msra.mxu0 0.0
  %1360 = vmatprep.subr.mxu0 0.0
  %1361 = vmatpush1.msra.mxu0 0.0
  %1362 = vmatprep.subr.mxu0 0.0
  %1363 = vmatpush1.msra.mxu0 0.0
  %1364 = vmatprep.subr.mxu0 0.0
  %1365 = vmatpush1.msra.mxu0 0.0
  %1366 = vmatprep.subr.mxu0 0.0
  %1367 = vmatpush1.msra.mxu0 0.0
  %1368 = vmatprep.subr.mxu0 0.0
  %1369 = vmatpush1.msra.mxu0 0.0
  %1370 = vmatprep.subr.mxu0 0.0
  %1371 = vmatpush1.msra.mxu0 0.0
  %1372 = vmatprep.subr.mxu0 0.0
  %1373 = vmatpush1.msra.mxu0 0.0
  %1374 = vmatprep.mubr.f32.mxu0 0.0
  %1375 = vmatmul.mubr.f32.gmra.mrb[0].mxu0 %v1305
  %v1376 = vpop.f32.mrb[0].mxu0
  %v1377 = vadd.f32 0.0, %v1376
  %v1378 = vpop.f32.mrb[0].mxu0
  %1379 = vmatprep.mubr.f32.mxu0 0.0
  %1380 = vmatmul.mubr.f32.gmra.mrb[0].mxu0 %v1308
  %v1381 = vpop.f32.mrb[0].mxu0
  %v1382 = vadd.f32 0.0, %v1381
  %v1383 = vpop.f32.mrb[0].mxu0
  %1384 = vdwg.mxu0
  %v1385 = vadd.f32 %v1203, %v1377
  %v1386 = vadd.f32 %v1208, %v1382
  %v1387 = vld [vmem:[%s8] sm:$0x1]
  %v1389 = vlaneseq
  %v1390 = vshrl.u32 %v1389, 7
  %v1391 = vsub.s32 0, %v1390
  %v1392 = vrot.slane %v1387, %v1391
  %v1394 = vadd.f32 %v1385, %v1392
  %v1395 = vadd.f32 %v1386, %v1392
  %v1396 = vmax.f32 %v1394, 0.0
  %v1397 = vmax.f32 %v1395, 0.0
  %v1398 = vld [vmem:[%s9] sm:$0x3]
  %v1400 = vsel %vm959, %v1398, 0
  %1402 = vmatprep.subr.mxu0 0.0
  %1403 = vmatpush1.msra.mxu0 %v1396
  %1404 = vmatprep.subr.mxu0 0.0
  %1405 = vmatpush1.msra.mxu0 %v1397
  %1406 = vmatprep.subr.mxu0 0.0
  %1407 = vmatpush1.msra.mxu0 0.0
  %1408 = vmatprep.subr.mxu0 0.0
  %1409 = vmatpush1.msra.mxu0 0.0
  %1410 = vmatprep.subr.mxu0 0.0
  %1411 = vmatpush1.msra.mxu0 0.0
  %1412 = vmatprep.subr.mxu0 0.0
  %1413 = vmatpush1.msra.mxu0 0.0
  %1414 = vmatprep.subr.mxu0 0.0
  %1415 = vmatpush1.msra.mxu0 0.0
  %1416 = vmatprep.subr.mxu0 0.0
  %1417 = vmatpush1.msra.mxu0 0.0
  %1418 = vmatprep.subr.mxu0 0.0
  %1419 = vmatpush1.msra.mxu0 0.0
  %1420 = vmatprep.subr.mxu0 0.0
  %1421 = vmatpush1.msra.mxu0 0.0
  %1422 = vmatprep.subr.mxu0 0.0
  %1423 = vmatpush1.msra.mxu0 0.0
  %1424 = vmatprep.subr.mxu0 0.0
  %1425 = vmatpush1.msra.mxu0 0.0
  %1426 = vmatprep.subr.mxu0 0.0
  %1427 = vmatpush1.msra.mxu0 0.0
  %1428 = vmatprep.subr.mxu0 0.0
  %1429 = vmatpush1.msra.mxu0 0.0
  %1430 = vmatprep.subr.mxu0 0.0
  %1431 = vmatpush1.msra.mxu0 0.0
  %1432 = vmatprep.subr.mxu0 0.0
  %1433 = vmatpush1.msra.mxu0 0.0
  %1434 = vmatprep.subr.mxu0 0.0
  %1435 = vmatpush1.msra.mxu0 0.0
  %1436 = vmatprep.subr.mxu0 0.0
  %1437 = vmatpush1.msra.mxu0 0.0
  %1438 = vmatprep.subr.mxu0 0.0
  %1439 = vmatpush1.msra.mxu0 0.0
  %1440 = vmatprep.subr.mxu0 0.0
  %1441 = vmatpush1.msra.mxu0 0.0
  %1442 = vmatprep.subr.mxu0 0.0
  %1443 = vmatpush1.msra.mxu0 0.0
  %1444 = vmatprep.subr.mxu0 0.0
  %1445 = vmatpush1.msra.mxu0 0.0
  %1446 = vmatprep.subr.mxu0 0.0
  %1447 = vmatpush1.msra.mxu0 0.0
  %1448 = vmatprep.subr.mxu0 0.0
  %1449 = vmatpush1.msra.mxu0 0.0
  %1450 = vmatprep.subr.mxu0 0.0
  %1451 = vmatpush1.msra.mxu0 0.0
  %1452 = vmatprep.subr.mxu0 0.0
  %1453 = vmatpush1.msra.mxu0 0.0
  %1454 = vmatprep.subr.mxu0 0.0
  %1455 = vmatpush1.msra.mxu0 0.0
  %1456 = vmatprep.subr.mxu0 0.0
  %1457 = vmatpush1.msra.mxu0 0.0
  %1458 = vmatprep.subr.mxu0 0.0
  %1459 = vmatpush1.msra.mxu0 0.0
  %1460 = vmatprep.subr.mxu0 0.0
  %1461 = vmatpush1.msra.mxu0 0.0
  %1462 = vmatprep.subr.mxu0 0.0
  %1463 = vmatpush1.msra.mxu0 0.0
  %1464 = vmatprep.subr.mxu0 0.0
  %1465 = vmatpush1.msra.mxu0 0.0
  %1466 = vmatprep.mubr.f32.mxu0 0.0
  %1467 = vmatmul.mubr.f32.gmra.mrb[0].mxu0 %v1400
  %v1468 = vpop.f32.mrb[0].mxu0
  %v1469 = vadd.f32 0.0, %v1468
  %v1470 = vpop.f32.mrb[0].mxu0
  %1471 = vdwg.mxu0
  %v1472 = vld [vmem:[%s10] sm:$0xff]
  %v1473 = vld [vmem:[%s10 + $0x8] sm:$0xff]
  %v1474 = vld [vmem:[%s10 + $0x10] sm:$0xff]
  %v1475 = vld [vmem:[%s10 + $0x18] sm:$0xff]
  %v1476 = vld [vmem:[%s10 + $0x20] sm:$0xff]
  %v1477 = vld [vmem:[%s10 + $0x28] sm:$0xff]
  %v1478 = vld [vmem:[%s10 + $0x30] sm:$0xff]
  %v1479 = vld [vmem:[%s10 + $0x38] sm:$0xff]
  %v1480 = vld [vmem:[%s10 + $0x40] sm:$0xff]
  %v1481 = vld [vmem:[%s10 + $0x48] sm:$0xff]
  %v1482 = vld [vmem:[%s10 + $0x50] sm:$0xff]
  %v1483 = vld [vmem:[%s10 + $0x58] sm:$0xff]
  %v1484 = vld [vmem:[%s10 + $0x60] sm:$0xff]
  %v1485 = vld [vmem:[%s10 + $0x68] sm:$0xff]
  %v1486 = vld [vmem:[%s10 + $0x70] sm:$0xff]
  %v1487 = vld [vmem:[%s10 + $0x78] sm:$0xff]
  %s1488 = scalar_lea.vmem %s9, 2
  %v1489 = vld [vmem:[%s1488] sm:$0x3]
  %v1491 = vsel %vm959, %v1489, 0
  %1493 = vmatprep.subr.mxu0 0.0
  %1494 = vmatpush1.msra.mxu0 %v1396
  %1495 = vmatprep.subr.mxu0 0.0
  %1496 = vmatpush1.msra.mxu0 %v1397
  %1497 = vmatprep.subr.mxu0 0.0
  %1498 = vmatpush1.msra.mxu0 0.0
  %1499 = vmatprep.subr.mxu0 0.0
  %1500 = vmatpush1.msra.mxu0 0.0
  %1501 = vmatprep.subr.mxu0 0.0
  %1502 = vmatpush1.msra.mxu0 0.0
  %1503 = vmatprep.subr.mxu0 0.0
  %1504 = vmatpush1.msra.mxu0 0.0
  %1505 = vmatprep.subr.mxu0 0.0
  %1506 = vmatpush1.msra.mxu0 0.0
  %1507 = vmatprep.subr.mxu0 0.0
  %1508 = vmatpush1.msra.mxu0 0.0
  %1509 = vmatprep.subr.mxu0 0.0
  %1510 = vmatpush1.msra.mxu0 0.0
  %1511 = vmatprep.subr.mxu0 0.0
  %1512 = vmatpush1.msra.mxu0 0.0
  %1513 = vmatprep.subr.mxu0 0.0
  %1514 = vmatpush1.msra.mxu0 0.0
  %1515 = vmatprep.subr.mxu0 0.0
  %1516 = vmatpush1.msra.mxu0 0.0
  %1517 = vmatprep.subr.mxu0 0.0
  %1518 = vmatpush1.msra.mxu0 0.0
  %1519 = vmatprep.subr.mxu0 0.0
  %1520 = vmatpush1.msra.mxu0 0.0
  %1521 = vmatprep.subr.mxu0 0.0
  %1522 = vmatpush1.msra.mxu0 0.0
  %1523 = vmatprep.subr.mxu0 0.0
  %1524 = vmatpush1.msra.mxu0 0.0
  %1525 = vmatprep.subr.mxu0 0.0
  %1526 = vmatpush1.msra.mxu0 0.0
  %1527 = vmatprep.subr.mxu0 0.0
  %1528 = vmatpush1.msra.mxu0 0.0
  %1529 = vmatprep.subr.mxu0 0.0
  %1530 = vmatpush1.msra.mxu0 0.0
  %1531 = vmatprep.subr.mxu0 0.0
  %1532 = vmatpush1.msra.mxu0 0.0
  %1533 = vmatprep.subr.mxu0 0.0
  %1534 = vmatpush1.msra.mxu0 0.0
  %1535 = vmatprep.subr.mxu0 0.0
  %1536 = vmatpush1.msra.mxu0 0.0
  %1537 = vmatprep.subr.mxu0 0.0
  %1538 = vmatpush1.msra.mxu0 0.0
  %1539 = vmatprep.subr.mxu0 0.0
  %1540 = vmatpush1.msra.mxu0 0.0
  %1541 = vmatprep.subr.mxu0 0.0
  %1542 = vmatpush1.msra.mxu0 0.0
  %1543 = vmatprep.subr.mxu0 0.0
  %1544 = vmatpush1.msra.mxu0 0.0
  %1545 = vmatprep.subr.mxu0 0.0
  %1546 = vmatpush1.msra.mxu0 0.0
  %1547 = vmatprep.subr.mxu0 0.0
  %1548 = vmatpush1.msra.mxu0 0.0
  %1549 = vmatprep.subr.mxu0 0.0
  %1550 = vmatpush1.msra.mxu0 0.0
  %1551 = vmatprep.subr.mxu0 0.0
  %1552 = vmatpush1.msra.mxu0 0.0
  %1553 = vmatprep.subr.mxu0 0.0
  %1554 = vmatpush1.msra.mxu0 0.0
  %1555 = vmatprep.subr.mxu0 0.0
  %1556 = vmatpush1.msra.mxu0 0.0
  %1557 = vmatprep.mubr.f32.mxu0 0.0
  %1558 = vmatmul.mubr.f32.gmra.mrb[0].mxu0 %v1491
  %v1559 = vpop.f32.mrb[0].mxu0
  %v1560 = vadd.f32 0.0, %v1559
  %v1561 = vpop.f32.mrb[0].mxu0
  %1562 = vdwg.mxu0
  %s1563 = scalar_lea.vmem %s10, 128
  %v1564 = vld [vmem:[%s1563] sm:$0xff]
  %v1565 = vld [vmem:[%s1563 + $0x8] sm:$0xff]
  %v1566 = vld [vmem:[%s1563 + $0x10] sm:$0xff]
  %v1567 = vld [vmem:[%s1563 + $0x18] sm:$0xff]
  %v1568 = vld [vmem:[%s1563 + $0x20] sm:$0xff]
  %v1569 = vld [vmem:[%s1563 + $0x28] sm:$0xff]
  %v1570 = vld [vmem:[%s1563 + $0x30] sm:$0xff]
  %v1571 = vld [vmem:[%s1563 + $0x38] sm:$0xff]
  %v1572 = vld [vmem:[%s1563 + $0x40] sm:$0xff]
  %v1573 = vld [vmem:[%s1563 + $0x48] sm:$0xff]
  %v1574 = vld [vmem:[%s1563 + $0x50] sm:$0xff]
  %v1575 = vld [vmem:[%s1563 + $0x58] sm:$0xff]
  %v1576 = vld [vmem:[%s1563 + $0x60] sm:$0xff]
  %v1577 = vld [vmem:[%s1563 + $0x68] sm:$0xff]
  %v1578 = vld [vmem:[%s1563 + $0x70] sm:$0xff]
  %v1579 = vld [vmem:[%s1563 + $0x78] sm:$0xff]
  %1580 = vmatprep.subr.mxu0 0.0
  %1581 = vmatpush1.msra.mxu0 %v1564
  %1582 = vmatprep.subr.mxu0 0.0
  %1583 = vmatpush1.msra.mxu0 %v1565
  %1584 = vmatprep.subr.mxu0 0.0
  %1585 = vmatpush1.msra.mxu0 %v1566
  %1586 = vmatprep.subr.mxu0 0.0
  %1587 = vmatpush1.msra.mxu0 %v1567
  %1588 = vmatprep.subr.mxu0 0.0
  %1589 = vmatpush1.msra.mxu0 %v1568
  %1590 = vmatprep.subr.mxu0 0.0
  %1591 = vmatpush1.msra.mxu0 %v1569
  %1592 = vmatprep.subr.mxu0 0.0
  %1593 = vmatpush1.msra.mxu0 %v1570
  %1594 = vmatprep.subr.mxu0 0.0
  %1595 = vmatpush1.msra.mxu0 %v1571
  %1596 = vmatprep.subr.mxu0 0.0
  %1597 = vmatpush1.msra.mxu0 %v1572
  %1598 = vmatprep.subr.mxu0 0.0
  %1599 = vmatpush1.msra.mxu0 %v1573
  %1600 = vmatprep.subr.mxu0 0.0
  %1601 = vmatpush1.msra.mxu0 %v1574
  %1602 = vmatprep.subr.mxu0 0.0
  %1603 = vmatpush1.msra.mxu0 %v1575
  %1604 = vmatprep.subr.mxu0 0.0
  %1605 = vmatpush1.msra.mxu0 %v1576
  %1606 = vmatprep.subr.mxu0 0.0
  %1607 = vmatpush1.msra.mxu0 %v1577
  %1608 = vmatprep.subr.mxu0 0.0
  %1609 = vmatpush1.msra.mxu0 %v1578
  %1610 = vmatprep.subr.mxu0 0.0
  %1611 = vmatpush1.msra.mxu0 %v1579
  %1612 = vmatprep.subr.mxu0 0.0
  %1613 = vmatpush1.msra.mxu0 0.0
  %1614 = vmatprep.subr.mxu0 0.0
  %1615 = vmatpush1.msra.mxu0 0.0
  %1616 = vmatprep.subr.mxu0 0.0
  %1617 = vmatpush1.msra.mxu0 0.0
  %1618 = vmatprep.subr.mxu0 0.0
  %1619 = vmatpush1.msra.mxu0 0.0
  %1620 = vmatprep.subr.mxu0 0.0
  %1621 = vmatpush1.msra.mxu0 0.0
  %1622 = vmatprep.subr.mxu0 0.0
  %1623 = vmatpush1.msra.mxu0 0.0
  %1624 = vmatprep.subr.mxu0 0.0
  %1625 = vmatpush1.msra.mxu0 0.0
  %1626 = vmatprep.subr.mxu0 0.0
  %1627 = vmatpush1.msra.mxu0 0.0
  %1628 = vmatprep.subr.mxu0 0.0
  %1629 = vmatpush1.msra.mxu0 0.0
  %1630 = vmatprep.subr.mxu0 0.0
  %1631 = vmatpush1.msra.mxu0 0.0
  %1632 = vmatprep.subr.mxu0 0.0
  %1633 = vmatpush1.msra.mxu0 0.0
  %1634 = vmatprep.subr.mxu0 0.0
  %1635 = vmatpush1.msra.mxu0 0.0
  %1636 = vmatprep.subr.mxu0 0.0
  %1637 = vmatpush1.msra.mxu0 0.0
  %1638 = vmatprep.subr.mxu0 0.0
  %1639 = vmatpush1.msra.mxu0 0.0
  %1640 = vmatprep.subr.mxu0 0.0
  %1641 = vmatpush1.msra.mxu0 0.0
  %1642 = vmatprep.subr.mxu0 0.0
  %1643 = vmatpush1.msra.mxu0 0.0
  %1644 = vmatprep.mubr.f32.mxu0 0.0
  %1645 = vmatmul.mubr.f32.gmra.mrb[0].mxu0 %v1560
  %v1646 = vpop.f32.mrb[0].mxu0
  %v1647 = vadd.f32 0.0, %v1646
  %v1648 = vpop.f32.mrb[0].mxu0
  %1649 = vdwg.mxu0
  %1650 = vmatprep.subr.mxu0 0.0
  %1651 = vmatpush1.msra.mxu0 %v1472
  %1652 = vmatprep.subr.mxu0 0.0
  %1653 = vmatpush1.msra.mxu0 %v1473
  %1654 = vmatprep.subr.mxu0 0.0
  %1655 = vmatpush1.msra.mxu0 %v1474
  %1656 = vmatprep.subr.mxu0 0.0
  %1657 = vmatpush1.msra.mxu0 %v1475
  %1658 = vmatprep.subr.mxu0 0.0
  %1659 = vmatpush1.msra.mxu0 %v1476
  %1660 = vmatprep.subr.mxu0 0.0
  %1661 = vmatpush1.msra.mxu0 %v1477
  %1662 = vmatprep.subr.mxu0 0.0
  %1663 = vmatpush1.msra.mxu0 %v1478
  %1664 = vmatprep.subr.mxu0 0.0
  %1665 = vmatpush1.msra.mxu0 %v1479
  %1666 = vmatprep.subr.mxu0 0.0
  %1667 = vmatpush1.msra.mxu0 %v1480
  %1668 = vmatprep.subr.mxu0 0.0
  %1669 = vmatpush1.msra.mxu0 %v1481
  %1670 = vmatprep.subr.mxu0 0.0
  %1671 = vmatpush1.msra.mxu0 %v1482
  %1672 = vmatprep.subr.mxu0 0.0
  %1673 = vmatpush1.msra.mxu0 %v1483
  %1674 = vmatprep.subr.mxu0 0.0
  %1675 = vmatpush1.msra.mxu0 %v1484
  %1676 = vmatprep.subr.mxu0 0.0
  %1677 = vmatpush1.msra.mxu0 %v1485
  %1678 = vmatprep.subr.mxu0 0.0
  %1679 = vmatpush1.msra.mxu0 %v1486
  %1680 = vmatprep.subr.mxu0 0.0
  %1681 = vmatpush1.msra.mxu0 %v1487
  %1682 = vmatprep.subr.mxu0 0.0
  %1683 = vmatpush1.msra.mxu0 0.0
  %1684 = vmatprep.subr.mxu0 0.0
  %1685 = vmatpush1.msra.mxu0 0.0
  %1686 = vmatprep.subr.mxu0 0.0
  %1687 = vmatpush1.msra.mxu0 0.0
  %1688 = vmatprep.subr.mxu0 0.0
  %1689 = vmatpush1.msra.mxu0 0.0
  %1690 = vmatprep.subr.mxu0 0.0
  %1691 = vmatpush1.msra.mxu0 0.0
  %1692 = vmatprep.subr.mxu0 0.0
  %1693 = vmatpush1.msra.mxu0 0.0
  %1694 = vmatprep.subr.mxu0 0.0
  %1695 = vmatpush1.msra.mxu0 0.0
  %1696 = vmatprep.subr.mxu0 0.0
  %1697 = vmatpush1.msra.mxu0 0.0
  %1698 = vmatprep.subr.mxu0 0.0
  %1699 = vmatpush1.msra.mxu0 0.0
  %1700 = vmatprep.subr.mxu0 0.0
  %1701 = vmatpush1.msra.mxu0 0.0
  %1702 = vmatprep.subr.mxu0 0.0
  %1703 = vmatpush1.msra.mxu0 0.0
  %1704 = vmatprep.subr.mxu0 0.0
  %1705 = vmatpush1.msra.mxu0 0.0
  %1706 = vmatprep.subr.mxu0 0.0
  %1707 = vmatpush1.msra.mxu0 0.0
  %1708 = vmatprep.subr.mxu0 0.0
  %1709 = vmatpush1.msra.mxu0 0.0
  %1710 = vmatprep.subr.mxu0 0.0
  %1711 = vmatpush1.msra.mxu0 0.0
  %1712 = vmatprep.subr.mxu0 0.0
  %1713 = vmatpush1.msra.mxu0 0.0
  %1714 = vmatprep.mubr.f32.mxu0 0.0
  %1715 = vmatmul.mubr.f32.gmra.mrb[0].mxu0 %v1469
  %v1716 = vpop.f32.mrb[0].mxu0
  %v1717 = vadd.f32 %v1647, %v1716
  %v1718 = vpop.f32.mrb[0].mxu0
  %1719 = vdwg.mxu0
  %s1720 = scalar_lea.vmem %s9, 4
  %v1721 = vld [vmem:[%s1720] sm:$0x3]
  %v1723 = vsel %vm959, %v1721, 0
  %1725 = vmatprep.subr.mxu0 0.0
  %1726 = vmatpush1.msra.mxu0 %v1396
  %1727 = vmatprep.subr.mxu0 0.0
  %1728 = vmatpush1.msra.mxu0 %v1397
  %1729 = vmatprep.subr.mxu0 0.0
  %1730 = vmatpush1.msra.mxu0 0.0
  %1731 = vmatprep.subr.mxu0 0.0
  %1732 = vmatpush1.msra.mxu0 0.0
  %1733 = vmatprep.subr.mxu0 0.0
  %1734 = vmatpush1.msra.mxu0 0.0
  %1735 = vmatprep.subr.mxu0 0.0
  %1736 = vmatpush1.msra.mxu0 0.0
  %1737 = vmatprep.subr.mxu0 0.0
  %1738 = vmatpush1.msra.mxu0 0.0
  %1739 = vmatprep.subr.mxu0 0.0
  %1740 = vmatpush1.msra.mxu0 0.0
  %1741 = vmatprep.subr.mxu0 0.0
  %1742 = vmatpush1.msra.mxu0 0.0
  %1743 = vmatprep.subr.mxu0 0.0
  %1744 = vmatpush1.msra.mxu0 0.0
  %1745 = vmatprep.subr.mxu0 0.0
  %1746 = vmatpush1.msra.mxu0 0.0
  %1747 = vmatprep.subr.mxu0 0.0
  %1748 = vmatpush1.msra.mxu0 0.0
  %1749 = vmatprep.subr.mxu0 0.0
  %1750 = vmatpush1.msra.mxu0 0.0
  %1751 = vmatprep.subr.mxu0 0.0
  %1752 = vmatpush1.msra.mxu0 0.0
  %1753 = vmatprep.subr.mxu0 0.0
  %1754 = vmatpush1.msra.mxu0 0.0
  %1755 = vmatprep.subr.mxu0 0.0
  %1756 = vmatpush1.msra.mxu0 0.0
  %1757 = vmatprep.subr.mxu0 0.0
  %1758 = vmatpush1.msra.mxu0 0.0
  %1759 = vmatprep.subr.mxu0 0.0
  %1760 = vmatpush1.msra.mxu0 0.0
  %1761 = vmatprep.subr.mxu0 0.0
  %1762 = vmatpush1.msra.mxu0 0.0
  %1763 = vmatprep.subr.mxu0 0.0
  %1764 = vmatpush1.msra.mxu0 0.0
  %1765 = vmatprep.subr.mxu0 0.0
  %1766 = vmatpush1.msra.mxu0 0.0
  %1767 = vmatprep.subr.mxu0 0.0
  %1768 = vmatpush1.msra.mxu0 0.0
  %1769 = vmatprep.subr.mxu0 0.0
  %1770 = vmatpush1.msra.mxu0 0.0
  %1771 = vmatprep.subr.mxu0 0.0
  %1772 = vmatpush1.msra.mxu0 0.0
  %1773 = vmatprep.subr.mxu0 0.0
  %1774 = vmatpush1.msra.mxu0 0.0
  %1775 = vmatprep.subr.mxu0 0.0
  %1776 = vmatpush1.msra.mxu0 0.0
  %1777 = vmatprep.subr.mxu0 0.0
  %1778 = vmatpush1.msra.mxu0 0.0
  %1779 = vmatprep.subr.mxu0 0.0
  %1780 = vmatpush1.msra.mxu0 0.0
  %1781 = vmatprep.subr.mxu0 0.0
  %1782 = vmatpush1.msra.mxu0 0.0
  %1783 = vmatprep.subr.mxu0 0.0
  %1784 = vmatpush1.msra.mxu0 0.0
  %1785 = vmatprep.subr.mxu0 0.0
  %1786 = vmatpush1.msra.mxu0 0.0
  %1787 = vmatprep.subr.mxu0 0.0
  %1788 = vmatpush1.msra.mxu0 0.0
  %1789 = vmatprep.mubr.f32.mxu0 0.0
  %1790 = vmatmul.mubr.f32.gmra.mrb[0].mxu0 %v1723
  %v1791 = vpop.f32.mrb[0].mxu0
  %v1792 = vadd.f32 0.0, %v1791
  %v1793 = vpop.f32.mrb[0].mxu0
  %1794 = vdwg.mxu0
  %s1795 = scalar_lea.vmem %s10, 256
  %v1796 = vld [vmem:[%s1795] sm:$0xff]
  %v1797 = vld [vmem:[%s1795 + $0x8] sm:$0xff]
  %v1798 = vld [vmem:[%s1795 + $0x10] sm:$0xff]
  %v1799 = vld [vmem:[%s1795 + $0x18] sm:$0xff]
  %v1800 = vld [vmem:[%s1795 + $0x20] sm:$0xff]
  %v1801 = vld [vmem:[%s1795 + $0x28] sm:$0xff]
  %v1802 = vld [vmem:[%s1795 + $0x30] sm:$0xff]
  %v1803 = vld [vmem:[%s1795 + $0x38] sm:$0xff]
  %v1804 = vld [vmem:[%s1795 + $0x40] sm:$0xff]
  %v1805 = vld [vmem:[%s1795 + $0x48] sm:$0xff]
  %v1806 = vld [vmem:[%s1795 + $0x50] sm:$0xff]
  %v1807 = vld [vmem:[%s1795 + $0x58] sm:$0xff]
  %v1808 = vld [vmem:[%s1795 + $0x60] sm:$0xff]
  %v1809 = vld [vmem:[%s1795 + $0x68] sm:$0xff]
  %v1810 = vld [vmem:[%s1795 + $0x70] sm:$0xff]
  %v1811 = vld [vmem:[%s1795 + $0x78] sm:$0xff]
  %1812 = vmatprep.subr.mxu0 0.0
  %1813 = vmatpush1.msra.mxu0 %v1796
  %1814 = vmatprep.subr.mxu0 0.0
  %1815 = vmatpush1.msra.mxu0 %v1797
  %1816 = vmatprep.subr.mxu0 0.0
  %1817 = vmatpush1.msra.mxu0 %v1798
  %1818 = vmatprep.subr.mxu0 0.0
  %1819 = vmatpush1.msra.mxu0 %v1799
  %1820 = vmatprep.subr.mxu0 0.0
  %1821 = vmatpush1.msra.mxu0 %v1800
  %1822 = vmatprep.subr.mxu0 0.0
  %1823 = vmatpush1.msra.mxu0 %v1801
  %1824 = vmatprep.subr.mxu0 0.0
  %1825 = vmatpush1.msra.mxu0 %v1802
  %1826 = vmatprep.subr.mxu0 0.0
  %1827 = vmatpush1.msra.mxu0 %v1803
  %1828 = vmatprep.subr.mxu0 0.0
  %1829 = vmatpush1.msra.mxu0 %v1804
  %1830 = vmatprep.subr.mxu0 0.0
  %1831 = vmatpush1.msra.mxu0 %v1805
  %1832 = vmatprep.subr.mxu0 0.0
  %1833 = vmatpush1.msra.mxu0 %v1806
  %1834 = vmatprep.subr.mxu0 0.0
  %1835 = vmatpush1.msra.mxu0 %v1807
  %1836 = vmatprep.subr.mxu0 0.0
  %1837 = vmatpush1.msra.mxu0 %v1808
  %1838 = vmatprep.subr.mxu0 0.0
  %1839 = vmatpush1.msra.mxu0 %v1809
  %1840 = vmatprep.subr.mxu0 0.0
  %1841 = vmatpush1.msra.mxu0 %v1810
  %1842 = vmatprep.subr.mxu0 0.0
  %1843 = vmatpush1.msra.mxu0 %v1811
  %1844 = vmatprep.subr.mxu0 0.0
  %1845 = vmatpush1.msra.mxu0 0.0
  %1846 = vmatprep.subr.mxu0 0.0
  %1847 = vmatpush1.msra.mxu0 0.0
  %1848 = vmatprep.subr.mxu0 0.0
  %1849 = vmatpush1.msra.mxu0 0.0
  %1850 = vmatprep.subr.mxu0 0.0
  %1851 = vmatpush1.msra.mxu0 0.0
  %1852 = vmatprep.subr.mxu0 0.0
  %1853 = vmatpush1.msra.mxu0 0.0
  %1854 = vmatprep.subr.mxu0 0.0
  %1855 = vmatpush1.msra.mxu0 0.0
  %1856 = vmatprep.subr.mxu0 0.0
  %1857 = vmatpush1.msra.mxu0 0.0
  %1858 = vmatprep.subr.mxu0 0.0
  %1859 = vmatpush1.msra.mxu0 0.0
  %1860 = vmatprep.subr.mxu0 0.0
  %1861 = vmatpush1.msra.mxu0 0.0
  %1862 = vmatprep.subr.mxu0 0.0
  %1863 = vmatpush1.msra.mxu0 0.0
  %1864 = vmatprep.subr.mxu0 0.0
  %1865 = vmatpush1.msra.mxu0 0.0
  %1866 = vmatprep.subr.mxu0 0.0
  %1867 = vmatpush1.msra.mxu0 0.0
  %1868 = vmatprep.subr.mxu0 0.0
  %1869 = vmatpush1.msra.mxu0 0.0
  %1870 = vmatprep.subr.mxu0 0.0
  %1871 = vmatpush1.msra.mxu0 0.0
  %1872 = vmatprep.subr.mxu0 0.0
  %1873 = vmatpush1.msra.mxu0 0.0
  %1874 = vmatprep.subr.mxu0 0.0
  %1875 = vmatpush1.msra.mxu0 0.0
  %1876 = vmatprep.mubr.f32.mxu0 0.0
  %1877 = vmatmul.mubr.f32.gmra.mrb[0].mxu0 %v1792
  %v1878 = vpop.f32.mrb[0].mxu0
  %v1879 = vadd.f32 0.0, %v1878
  %v1880 = vpop.f32.mrb[0].mxu0
  %1881 = vdwg.mxu0
  %v1882 = vadd.f32 %v1717, %v1879
  %s1883 = scalar_lea.vmem %s9, 6
  %v1884 = vld [vmem:[%s1883] sm:$0x3]
  %v1886 = vsel %vm959, %v1884, 0
  %1888 = vmatprep.subr.mxu0 0.0
  %1889 = vmatpush1.msra.mxu0 %v1396
  %1890 = vmatprep.subr.mxu0 0.0
  %1891 = vmatpush1.msra.mxu0 %v1397
  %1892 = vmatprep.subr.mxu0 0.0
  %1893 = vmatpush1.msra.mxu0 0.0
  %1894 = vmatprep.subr.mxu0 0.0
  %1895 = vmatpush1.msra.mxu0 0.0
  %1896 = vmatprep.subr.mxu0 0.0
  %1897 = vmatpush1.msra.mxu0 0.0
  %1898 = vmatprep.subr.mxu0 0.0
  %1899 = vmatpush1.msra.mxu0 0.0
  %1900 = vmatprep.subr.mxu0 0.0
  %1901 = vmatpush1.msra.mxu0 0.0
  %1902 = vmatprep.subr.mxu0 0.0
  %1903 = vmatpush1.msra.mxu0 0.0
  %1904 = vmatprep.subr.mxu0 0.0
  %1905 = vmatpush1.msra.mxu0 0.0
  %1906 = vmatprep.subr.mxu0 0.0
  %1907 = vmatpush1.msra.mxu0 0.0
  %1908 = vmatprep.subr.mxu0 0.0
  %1909 = vmatpush1.msra.mxu0 0.0
  %1910 = vmatprep.subr.mxu0 0.0
  %1911 = vmatpush1.msra.mxu0 0.0
  %1912 = vmatprep.subr.mxu0 0.0
  %1913 = vmatpush1.msra.mxu0 0.0
  %1914 = vmatprep.subr.mxu0 0.0
  %1915 = vmatpush1.msra.mxu0 0.0
  %1916 = vmatprep.subr.mxu0 0.0
  %1917 = vmatpush1.msra.mxu0 0.0
  %1918 = vmatprep.subr.mxu0 0.0
  %1919 = vmatpush1.msra.mxu0 0.0
  %1920 = vmatprep.subr.mxu0 0.0
  %1921 = vmatpush1.msra.mxu0 0.0
  %1922 = vmatprep.subr.mxu0 0.0
  %1923 = vmatpush1.msra.mxu0 0.0
  %1924 = vmatprep.subr.mxu0 0.0
  %1925 = vmatpush1.msra.mxu0 0.0
  %1926 = vmatprep.subr.mxu0 0.0
  %1927 = vmatpush1.msra.mxu0 0.0
  %1928 = vmatprep.subr.mxu0 0.0
  %1929 = vmatpush1.msra.mxu0 0.0
  %1930 = vmatprep.subr.mxu0 0.0
  %1931 = vmatpush1.msra.mxu0 0.0
  %1932 = vmatprep.subr.mxu0 0.0
  %1933 = vmatpush1.msra.mxu0 0.0
  %1934 = vmatprep.subr.mxu0 0.0
  %1935 = vmatpush1.msra.mxu0 0.0
  %1936 = vmatprep.subr.mxu0 0.0
  %1937 = vmatpush1.msra.mxu0 0.0
  %1938 = vmatprep.subr.mxu0 0.0
  %1939 = vmatpush1.msra.mxu0 0.0
  %1940 = vmatprep.subr.mxu0 0.0
  %1941 = vmatpush1.msra.mxu0 0.0
  %1942 = vmatprep.subr.mxu0 0.0
  %1943 = vmatpush1.msra.mxu0 0.0
  %1944 = vmatprep.subr.mxu0 0.0
  %1945 = vmatpush1.msra.mxu0 0.0
  %1946 = vmatprep.subr.mxu0 0.0
  %1947 = vmatpush1.msra.mxu0 0.0
  %1948 = vmatprep.subr.mxu0 0.0
  %1949 = vmatpush1.msra.mxu0 0.0
  %1950 = vmatprep.subr.mxu0 0.0
  %1951 = vmatpush1.msra.mxu0 0.0
  %1952 = vmatprep.mubr.f32.mxu0 0.0
  %1953 = vmatmul.mubr.f32.gmra.mrb[0].mxu0 %v1886
  %v1954 = vpop.f32.mrb[0].mxu0
  %v1955 = vadd.f32 0.0, %v1954
  %v1956 = vpop.f32.mrb[0].mxu0
  %1957 = vdwg.mxu0
  %s1958 = scalar_lea.vmem %s10, 384
  %v1959 = vld [vmem:[%s1958] sm:$0xff]
  %v1960 = vld [vmem:[%s1958 + $0x8] sm:$0xff]
  %v1961 = vld [vmem:[%s1958 + $0x10] sm:$0xff]
  %v1962 = vld [vmem:[%s1958 + $0x18] sm:$0xff]
  %v1963 = vld [vmem:[%s1958 + $0x20] sm:$0xff]
  %v1964 = vld [vmem:[%s1958 + $0x28] sm:$0xff]
  %v1965 = vld [vmem:[%s1958 + $0x30] sm:$0xff]
  %v1966 = vld [vmem:[%s1958 + $0x38] sm:$0xff]
  %v1967 = vld [vmem:[%s1958 + $0x40] sm:$0xff]
  %v1968 = vld [vmem:[%s1958 + $0x48] sm:$0xff]
  %v1969 = vld [vmem:[%s1958 + $0x50] sm:$0xff]
  %v1970 = vld [vmem:[%s1958 + $0x58] sm:$0xff]
  %v1971 = vld [vmem:[%s1958 + $0x60] sm:$0xff]
  %v1972 = vld [vmem:[%s1958 + $0x68] sm:$0xff]
  %v1973 = vld [vmem:[%s1958 + $0x70] sm:$0xff]
  %v1974 = vld [vmem:[%s1958 + $0x78] sm:$0xff]
  %1975 = vmatprep.subr.mxu0 0.0
  %1976 = vmatpush1.msra.mxu0 %v1959
  %1977 = vmatprep.subr.mxu0 0.0
  %1978 = vmatpush1.msra.mxu0 %v1960
  %1979 = vmatprep.subr.mxu0 0.0
  %1980 = vmatpush1.msra.mxu0 %v1961
  %1981 = vmatprep.subr.mxu0 0.0
  %1982 = vmatpush1.msra.mxu0 %v1962
  %1983 = vmatprep.subr.mxu0 0.0
  %1984 = vmatpush1.msra.mxu0 %v1963
  %1985 = vmatprep.subr.mxu0 0.0
  %1986 = vmatpush1.msra.mxu0 %v1964
  %1987 = vmatprep.subr.mxu0 0.0
  %1988 = vmatpush1.msra.mxu0 %v1965
  %1989 = vmatprep.subr.mxu0 0.0
  %1990 = vmatpush1.msra.mxu0 %v1966
  %1991 = vmatprep.subr.mxu0 0.0
  %1992 = vmatpush1.msra.mxu0 %v1967
  %1993 = vmatprep.subr.mxu0 0.0
  %1994 = vmatpush1.msra.mxu0 %v1968
  %1995 = vmatprep.subr.mxu0 0.0
  %1996 = vmatpush1.msra.mxu0 %v1969
  %1997 = vmatprep.subr.mxu0 0.0
  %1998 = vmatpush1.msra.mxu0 %v1970
  %1999 = vmatprep.subr.mxu0 0.0
  %2000 = vmatpush1.msra.mxu0 %v1971
  %2001 = vmatprep.subr.mxu0 0.0
  %2002 = vmatpush1.msra.mxu0 %v1972
  %2003 = vmatprep.subr.mxu0 0.0
  %2004 = vmatpush1.msra.mxu0 %v1973
  %2005 = vmatprep.subr.mxu0 0.0
  %2006 = vmatpush1.msra.mxu0 %v1974
  %2007 = vmatprep.subr.mxu0 0.0
  %2008 = vmatpush1.msra.mxu0 0.0
  %2009 = vmatprep.subr.mxu0 0.0
  %2010 = vmatpush1.msra.mxu0 0.0
  %2011 = vmatprep.subr.mxu0 0.0
  %2012 = vmatpush1.msra.mxu0 0.0
  %2013 = vmatprep.subr.mxu0 0.0
  %2014 = vmatpush1.msra.mxu0 0.0
  %2015 = vmatprep.subr.mxu0 0.0
  %2016 = vmatpush1.msra.mxu0 0.0
  %2017 = vmatprep.subr.mxu0 0.0
  %2018 = vmatpush1.msra.mxu0 0.0
  %2019 = vmatprep.subr.mxu0 0.0
  %2020 = vmatpush1.msra.mxu0 0.0
  %2021 = vmatprep.subr.mxu0 0.0
  %2022 = vmatpush1.msra.mxu0 0.0
  %2023 = vmatprep.subr.mxu0 0.0
  %2024 = vmatpush1.msra.mxu0 0.0
  %2025 = vmatprep.subr.mxu0 0.0
  %2026 = vmatpush1.msra.mxu0 0.0
  %2027 = vmatprep.subr.mxu0 0.0
  %2028 = vmatpush1.msra.mxu0 0.0
  %2029 = vmatprep.subr.mxu0 0.0
  %2030 = vmatpush1.msra.mxu0 0.0
  %2031 = vmatprep.subr.mxu0 0.0
  %2032 = vmatpush1.msra.mxu0 0.0
  %2033 = vmatprep.subr.mxu0 0.0
  %2034 = vmatpush1.msra.mxu0 0.0
  %2035 = vmatprep.subr.mxu0 0.0
  %2036 = vmatpush1.msra.mxu0 0.0
  %2037 = vmatprep.subr.mxu0 0.0
  %2038 = vmatpush1.msra.mxu0 0.0
  %2039 = vmatprep.mubr.f32.mxu0 0.0
  %2040 = vmatmul.mubr.f32.gmra.mrb[0].mxu0 %v1955
  %v2041 = vpop.f32.mrb[0].mxu0
  %v2042 = vadd.f32 0.0, %v2041
  %v2043 = vpop.f32.mrb[0].mxu0
  %2044 = vdwg.mxu0
  %v2045 = vadd.f32 %v1882, %v2042
  %v2046 = vld [vmem:[%s11] sm:$0x1]
  %v2048 = vlaneseq
  %v2049 = vshrl.u32 %v2048, 7
  %v2050 = vsub.s32 0, %v2049
  %v2051 = vrot.slane %v2046, %v2050
  %v2053 = vadd.f32 %v2045, %v2051
  %v2054 = vmax.f32 %v2053, 0.0
  %v2055 = vld [vmem:[%s12] sm:$0x1]
  %v2057 = vlaneseq
  %v2058 = vshrl.u32 %v2057, 7
  %v2059 = vsub.s32 0, %v2058
  %v2060 = vrot.slane %v2055, %v2059
  %v2062 = vmul.f32 %v2054, %v2060
  %vm2063 = vcmask 254976
  %v2064 = vsel %vm2063, %v2062, 0.0
  %2065 = vadd.xlane.f32.xlu0 %v2064
  %v2066 = vpop.xlane.xlu0 %2065
  %v2067 = vld [vmem:[#allocation2] sm:$0x1]
  %v2069 = vlaneseq
  %v2070 = vshrl.u32 %v2069, 7
  %v2071 = vsub.s32 0, %v2070
  %v2072 = vrot.slane %v2067, %v2071
  %v2074 = vadd.f32 %v2066, %v2072
  %vm2075 = vcmask 1024
  %2076 = vst.msk [vmem:[%s14] sm:$0x3] %vm2075, %v2074
  // Predicated region
  $region58: #{convnet_forward.1} parent=0 // pred_check
    _
  $region59: #{convnet_forward.1} parent=0 // pred_check_branch
    %2078 = sbr.rel (0) target = $region61
  $region60: #{convnet_forward.1} parent=0 // pred_region
    _
  $region61: #{convnet_forward.1} parent=0 // pred_fallthru
    _
  // Predicated region
  $region62: #{convnet_forward.1} parent=0 // pred_check
    _
  $region63: #{convnet_forward.1} parent=0 // pred_check_branch
    %2080 = sbr.rel (0) target = $region65
  $region64: #{convnet_forward.1} parent=0 // pred_region
    _
  $region65: #{convnet_forward.1} parent=0 // pred_fallthru
    _

</llo_original>
